<compile_context>
chip_gen: v7x
topology: tpu7x:2x2x1
jax: 0.10.0
libtpu: 0.0.40
codegen_flags: <defaults>
</compile_context>

<pallas_src>
import numpy as np
import jax
import jax.numpy as jnp
from jax.experimental import pallas as pl
from jax.experimental.pallas import tpu as pltpu

P = 8                         # P_portion
CUBE = P * P * P              # 512 cube entries, flattened index r = xi*64 + yi*8 + ti
NSCAL = 16                    # scalar rows: [gt(3), est_pred(3), P_cov_pred(9), pad]
NOUT = 16                     # output rows: [loss, est(3), P_cov(9), pad(3)]
NMOM = 8                      # moment rows: [1, x, y, t, x^2, y^2, t^2, 0]
LAMDA = 0.1
PI = float(np.pi)
DEG2RAD = PI / 180.0


# ----------------------------- elementwise helpers -----------------------------
def _wrap_to_pi(x):
    # Closed-form wrapToPi -> (-pi, pi]. Differs from the reference while-loop
    # only at exactly representable multiples of pi (benign).
    two_pi = 2.0 * PI
    w = x - two_pi * jnp.floor((x + PI) / two_pi)        # [-pi, pi)
    return jnp.where(w <= -PI, w + two_pi, w)


def _det3(m):
    a, b, c, d, e, f, g, h, i = m
    return a * (e * i - f * h) - b * (d * i - f * g) + c * (d * h - e * g)


def _inv3(m):
    a, b, c, d, e, f, g, h, i = m
    A = e * i - f * h
    B = -(d * i - f * g)
    C = d * h - e * g
    D = -(b * i - c * h)
    E = a * i - c * g
    F = -(a * h - b * g)
    G = b * f - c * e
    H = -(a * f - c * d)
    I = a * e - b * d
    det = a * A + b * B + c * C
    inv_det = 1.0 / det
    return (A * inv_det, D * inv_det, G * inv_det,
            B * inv_det, E * inv_det, H * inv_det,
            C * inv_det, F * inv_det, I * inv_det)


def _matmul3(a, b):
    out = []
    for i in range(3):
        for j in range(3):
            out.append(a[3 * i + 0] * b[0 * 3 + j] +
                       a[3 * i + 1] * b[1 * 3 + j] +
                       a[3 * i + 2] * b[2 * 3 + j])
    return tuple(out)


def _matvec3(a, v):
    return tuple(a[3 * i + 0] * v[0] + a[3 * i + 1] * v[1] + a[3 * i + 2] * v[2]
                 for i in range(3))


# ------------------------------- the kernel -------------------------------
def ekf_kernel(avg_ref,        # VMEM (CUBE, TB)  cube logits, lane = batch element
               scal_ref,       # VMEM (NSCAL, TB) per-step scalars, lane = batch element
               mom_ref,        # VMEM (NMOM, CUBE) constant moment matrix
               out_ref):       # VMEM (NOUT, TB)  packed outputs, lane = batch element
    # ---- getDeltaMeanVar: stable unnormalized softmax + moments via one MXU matmul
    neg = -avg_ref[...]                                       # (CUBE, TB)
    mx = jnp.max(neg, axis=0, keepdims=True)                  # (1, TB) per-element max
    e = jnp.exp(neg - mx)                                     # (CUBE, TB) softmax numerator

    # moments[r] = sum_cube e * {1, x, y, t, x^2, y^2, t^2} -> (NMOM, TB)
    mom = jnp.dot(mom_ref[...], e, preferred_element_type=jnp.float32)
    inv_den = 1.0 / mom[0:1, :]                               # normalization denominator
    mean_x = mom[1:2, :] * inv_den
    mean_y = mom[2:3, :] * inv_den
    mean_t = mom[3:4, :] * inv_den                            # already radians
    var_x = mom[4:5, :] * inv_den - mean_x * mean_x
    var_y = mom[5:6, :] * inv_den - mean_y * mean_y
    var_t = mom[6:7, :] * inv_den - mean_t * mean_t

    # ---- per-step scalars as (1, TB) lane vectors ----
    g0 = scal_ref[0:1, :]
    g1 = scal_ref[1:2, :]
    g2 = scal_ref[2:3, :]
    ex = scal_ref[3:4, :]
    ey = scal_ref[4:5, :]
    et = scal_ref[5:6, :]
    p = tuple(scal_ref[6 + i:7 + i, :] for i in range(9))     # P_cov_pred, row-major

    # ---- getGlobalObservation ----
    z2 = _wrap_to_pi(et + mean_t)
    cz = jnp.cos(z2)
    sz = jnp.sin(z2)
    z0 = ex + cz * mean_x - sz * mean_y
    z1 = ey + sz * mean_x + cz * mean_y

    # ---- EKF update: Jacob_H = I  =>  S = P_pred + diag(var),  K = P_pred @ S^-1
    s = (p[0] + var_x, p[1],          p[2],
         p[3],          p[4] + var_y, p[5],
         p[6],          p[7],          p[8] + var_t)
    s_inv = _inv3(s)
    k = _matmul3(p, s_inv)

    d0 = z0 - ex
    d1 = z1 - ey
    d2 = _wrap_to_pi(z2 - et)
    kd = _matvec3(k, (d0, d1, d2))
    e0 = ex + kd[0]
    e1 = ey + kd[1]
    e2 = _wrap_to_pi(et + kd[2])

    # P_cov = (I - K) @ P_pred
    ik = (1.0 - k[0], -k[1],       -k[2],
          -k[3],       1.0 - k[4], -k[5],
          -k[6],       -k[7],       1.0 - k[8])
    pc = _matmul3(ik, p)

    # loss = err^T P_cov^-1 err + lamda * det(P_cov)
    r0 = g0 - e0
    r1 = g1 - e1
    r2 = _wrap_to_pi(g2 - e2)
    pc_inv = _inv3(pc)
    v = _matvec3(pc_inv, (r0, r1, r2))
    err_loss = r0 * v[0] + r1 * v[1] + r2 * v[2]
    loss = err_loss + LAMDA * _det3(pc)
    # TODO(synk): the module's in-forward `print(...)` logging side effect is omitted.

    # ---- lane-dense row stores (no masked-lane packing, no select chain) ----
    out_ref[0:1, :] = loss
    out_ref[1:2, :] = e0
    out_ref[2:3, :] = e1
    out_ref[3:4, :] = e2
    for i in range(9):
        out_ref[4 + i:5 + i, :] = pc[i]
    out_ref[13:16, :] = jnp.zeros((3, out_ref.shape[1]), out_ref.dtype)


# ------------------------------ wrapper ------------------------------------
def ekf_forward_batch(avg_vectors, gt_pose, est_xyt_pred, P_cov_pred,
                      x_cube, y_cube, t_cube, *, tb=128):
    """Batched EKF forward: B independent steps, TB per grid iteration."""
    B = avg_vectors.shape[0]
    nb = max(1, -(-B // tb))
    Bp = nb * tb

    # cube, batch on lanes: (CUBE, B)
    avg_t = avg_vectors.reshape(B, CUBE).astype(jnp.float32).T

    # per-step scalars, batch on lanes: (NSCAL, B)
    scal = jnp.concatenate(
        [gt_pose.reshape(B, 3).astype(jnp.float32),
         est_xyt_pred.reshape(B, 3).astype(jnp.float32),
         P_cov_pred.reshape(B, 9).astype(jnp.float32),
         jnp.zeros((B, 1), jnp.float32)], axis=1).T

    if Bp != B:
        pad = Bp - B
        avg_t = jnp.pad(avg_t, ((0, 0), (0, pad)))
        # benign padded columns: zero poses, identity covariance (rows 6, 10, 14)
        pad_col = jnp.zeros((NSCAL, pad), jnp.float32)
        pad_col = pad_col.at[jnp.array([6, 10, 14]), :].set(1.0)
        scal = jnp.concatenate([scal, pad_col], axis=1)

    # constant moment matrix (NMOM, CUBE): rows = [1, x, y, t_rad, x^2, y^2, t_rad^2, 0]
    # flattened cube index r = xi*64 + yi*8 + ti (matches reshape(P, P, P) order)
    x = x_cube.reshape(P).astype(jnp.float32)
    y = y_cube.reshape(P).astype(jnp.float32)
    t = (t_cube.reshape(P) * DEG2RAD).astype(jnp.float32)
    xg = jnp.repeat(x, P * P)
    yg = jnp.tile(jnp.repeat(y, P), P)
    tg = jnp.tile(t, P * P)
    ones = jnp.ones((CUBE,), jnp.float32)
    zeros = jnp.zeros((CUBE,), jnp.float32)
    mom_mat = jnp.stack([ones, xg, yg, tg, xg * xg, yg * yg, tg * tg, zeros], axis=0)

    grid_spec = pltpu.PrefetchScalarGridSpec(
        num_scalar_prefetch=0,
        grid=(nb,),
        in_specs=[
            pl.BlockSpec((CUBE, tb), lambda b: (0, b)),      # batch block of cube logits
            pl.BlockSpec((NSCAL, tb), lambda b: (0, b)),     # batch block of scalars
            pl.BlockSpec((NMOM, CUBE), lambda b: (0, 0)),    # grid-invariant constant
        ],
        out_specs=pl.BlockSpec((NOUT, tb), lambda b: (0, b)),
    )

    cost = pl.CostEstimate(
        flops=int(Bp) * (2 * NMOM * CUBE + 1400),
        transcendentals=int(Bp) * (CUBE + 4),
        bytes_accessed=int(Bp) * (CUBE + NSCAL + NOUT) * 4 + NMOM * CUBE * 4,
    )

    out = pl.pallas_call(
        ekf_kernel,
        out_shape=jax.ShapeDtypeStruct((NOUT, Bp), jnp.float32),
        grid_spec=grid_spec,
        compiler_params=pltpu.CompilerParams(dimension_semantics=("parallel",)),
        cost_estimate=cost,
    )(avg_t, scal, mom_mat)

    out = out[:, :B]
    loss = out[0, :]
    est = out[1:4, :].T
    pcov = out[4:13, :].T.reshape(B, 3, 3)
    return loss, est, pcov


# --------------------------- numpy reference --------------------------------
def ref_forward_np(avg_vector, gt_pose, est_pred, p_pred, x_cube, y_cube, t_cube, lamda):
    avg = np.asarray(avg_vector, np.float64)
    neg = -avg
    ex = np.exp(neg - neg.max())
    sm = (ex / ex.sum()).reshape(P, P, P)
    prob_x = sm.sum(axis=(1, 2))
    prob_y = sm.sum(axis=(0, 2))
    prob_t = sm.sum(axis=(0, 1))
    x_cube = np.asarray(x_cube, np.float64)
    y_cube = np.asarray(y_cube, np.float64)
    t_cube = np.asarray(t_cube, np.float64)
    mean_x = x_cube @ prob_x
    mean_y = y_cube @ prob_y
    mean_t = (t_cube @ prob_t) * np.pi / 180.0
    t_rad = t_cube * np.pi / 180.0
    var_x = np.sum((x_cube - mean_x) * prob_x * (x_cube - mean_x))
    var_y = np.sum((y_cube - mean_y) * prob_y * (y_cube - mean_y))
    var_t = np.sum((t_rad - mean_t) * prob_t * (t_rad - mean_t))

    def wrap(v):
        w = v - 2 * np.pi * np.floor((v + np.pi) / (2 * np.pi))
        return w + 2 * np.pi if w <= -np.pi else w

    est_pred = np.asarray(est_pred, np.float64)
    p_pred = np.asarray(p_pred, np.float64)
    z2 = wrap(est_pred[2] + mean_t)
    z0 = est_pred[0] + np.cos(z2) * mean_x - np.sin(z2) * mean_y
    z1 = est_pred[1] + np.sin(z2) * mean_x + np.cos(z2) * mean_y
    Z = np.array([z0, z1, z2])
    S = p_pred + np.diag([var_x, var_y, var_t])
    K = p_pred @ np.linalg.inv(S)
    delta = Z - est_pred
    delta[2] = wrap(delta[2])
    est = est_pred + K @ delta
    est[2] = wrap(est[2])
    pcov = (np.eye(3) - K) @ p_pred
    gt = np.asarray(gt_pose, np.float64)
    err = gt - est
    err[2] = wrap(err[2])
    err_loss = err @ np.linalg.inv(pcov) @ err
    cov_loss = np.linalg.det(pcov)
    return err_loss + lamda * cov_loss, est, pcov


# --------------------------------- main --------------------------------------
if __name__ == "__main__":
    key = jax.random.PRNGKey(0)
    k1, k2, k3, k4 = jax.random.split(key, 4)
    B = 256           # 2 grid blocks of TB=128 -> both v7x TCs busy, overhead amortized

    # module "constructor" data (deterministic, synthetic)
    d_xyt = np.stack([np.linspace(-0.5, 0.5, P),
                      np.linspace(-0.5, 0.5, P),
                      np.linspace(-5.0, 5.0, P)]).astype(np.float32)   # (3, P_portion)

    # batched forward inputs (B independent EKF steps)
    avg_vectors = jax.random.normal(k1, (B, P ** 3), dtype=jnp.float32)
    base_pose = jnp.array([1.0, 2.0, 0.3], jnp.float32)
    est_pred = base_pose + 0.1 * jax.random.normal(k2, (B, 3), dtype=jnp.float32)
    gt_pose = est_pred + 0.05 * jax.random.normal(k3, (B, 3), dtype=jnp.float32)
    base_cov = jnp.array([[0.5, 0.1, 0.0],
                          [0.1, 0.4, 0.05],
                          [0.0, 0.05, 0.3]], jnp.float32)
    pert = 0.02 * jax.random.normal(k4, (B, 3, 3), dtype=jnp.float32)
    pert = 0.5 * (pert + jnp.transpose(pert, (0, 2, 1)))
    P_cov_pred = base_cov[None, :, :] + pert

    loss, est, pcov = ekf_forward_batch(
        avg_vectors, gt_pose, est_pred, P_cov_pred,
        jnp.asarray(d_xyt[0]), jnp.asarray(d_xyt[1]), jnp.asarray(d_xyt[2]),
        tb=128)
    jax.block_until_ready((loss, est, pcov))

    # verify every batched step against the float64 numpy reference
    loss_np = np.asarray(loss)
    est_np = np.asarray(est)
    pcov_np = np.asarray(pcov)
    for i in range(B):
        l_ref, e_ref, p_ref = ref_forward_np(
            np.asarray(avg_vectors[i]), np.asarray(gt_pose[i]), np.asarray(est_pred[i]),
            np.asarray(P_cov_pred[i]), d_xyt[0], d_xyt[1], d_xyt[2], LAMDA)
        np.testing.assert_allclose(float(loss_np[i]), l_ref, rtol=2e-3, atol=2e-4)
        np.testing.assert_allclose(est_np[i], e_ref, rtol=2e-3, atol=2e-4)
        np.testing.assert_allclose(pcov_np[i], p_ref, rtol=2e-3, atol=2e-4)

    print("KERNEL_OK")
</pallas_src>

<mosaic_0001>
module attributes {stable_mosaic.version = 11 : i64} {
  func.func @ekf_kernel(%arg0: i32, %arg1: memref<512x128xf32, #tpu.memory_space<vmem>>, %arg2: memref<16x128xf32, #tpu.memory_space<vmem>>, %arg3: memref<8x512xf32, #tpu.memory_space<vmem>>, %arg4: memref<16x128xf32, #tpu.memory_space<vmem>>) attributes {dimension_semantics = [#tpu.dimension_semantics<parallel>], iteration_bounds = array<i64: 2>, scalar_prefetch = 0 : i64, scratch_operands = 0 : i64, tpu.core_type = #tpu.core_type<tc>, window_params = [{transform_indices = @transform_0, window_bounds = array<i64: 512, 128>}, {transform_indices = @transform_1, window_bounds = array<i64: 16, 128>}, {pipeline_mode = #tpu.pipeline_mode<synchronous>, transform_indices = @transform_2, window_bounds = array<i64: 8, 512>}, {transform_indices = @transform_3, window_bounds = array<i64: 16, 128>}]} {
    %c0 = arith.constant 0 : index
    %c0_0 = arith.constant 0 : index
    %0 = vector.load %arg1[%c0, %c0_0] : memref<512x128xf32, #tpu.memory_space<vmem>>, vector<512x128xf32>
    %cst = arith.constant 0.000000e+00 : f32
    %1 = vector.broadcast %cst : f32 to vector<512x128xf32>
    %2 = arith.subf %1, %0 : vector<512x128xf32>
    %cst_1 = arith.constant dense<0xFF800000> : vector<128xf32>
    %3 = vector.multi_reduction <maximumf>, %2, %cst_1 [0] : vector<512x128xf32> to vector<128xf32>
    %4 = vector.shape_cast %3 : vector<128xf32> to vector<1x128xf32>
    %5 = vector.broadcast %4 : vector<1x128xf32> to vector<512x128xf32>
    %6 = arith.subf %2, %5 : vector<512x128xf32>
    %7 = math.exp %6 : vector<512x128xf32>
    %c0_2 = arith.constant 0 : index
    %c0_3 = arith.constant 0 : index
    %8 = vector.load %arg3[%c0_2, %c0_3] : memref<8x512xf32, #tpu.memory_space<vmem>>, vector<8x512xf32>
    %cst_4 = arith.constant dense<0.000000e+00> : vector<8x128xf32>
    %9 = tpu.matmul %8, %7, %cst_4 {dimension_numbers = #tpu.dot_dimension_numbers<[1], [0], [0], [1], [0, 0, 1, 1], [], []>} : vector<8x512xf32>, vector<512x128xf32>, vector<8x128xf32> -> vector<8x128xf32>
    %10 = vector.extract_strided_slice %9 {offsets = [0, 0], sizes = [1, 128], strides = [1, 1]} : vector<8x128xf32> to vector<1x128xf32>
    %cst_5 = arith.constant 1.000000e+00 : f32
    %11 = vector.broadcast %cst_5 : f32 to vector<1x128xf32>
    %12 = arith.divf %11, %10 : vector<1x128xf32>
    %13 = vector.extract_strided_slice %9 {offsets = [1, 0], sizes = [1, 128], strides = [1, 1]} : vector<8x128xf32> to vector<1x128xf32>
    %14 = arith.mulf %13, %12 : vector<1x128xf32>
    %15 = vector.extract_strided_slice %9 {offsets = [2, 0], sizes = [1, 128], strides = [1, 1]} : vector<8x128xf32> to vector<1x128xf32>
    %16 = arith.mulf %15, %12 : vector<1x128xf32>
    %17 = vector.extract_strided_slice %9 {offsets = [3, 0], sizes = [1, 128], strides = [1, 1]} : vector<8x128xf32> to vector<1x128xf32>
    %18 = arith.mulf %17, %12 : vector<1x128xf32>
    %19 = vector.extract_strided_slice %9 {offsets = [4, 0], sizes = [1, 128], strides = [1, 1]} : vector<8x128xf32> to vector<1x128xf32>
    %20 = arith.mulf %19, %12 : vector<1x128xf32>
    %21 = arith.mulf %14, %14 : vector<1x128xf32>
    %22 = arith.subf %20, %21 : vector<1x128xf32>
    %23 = vector.extract_strided_slice %9 {offsets = [5, 0], sizes = [1, 128], strides = [1, 1]} : vector<8x128xf32> to vector<1x128xf32>
    %24 = arith.mulf %23, %12 : vector<1x128xf32>
    %25 = arith.mulf %16, %16 : vector<1x128xf32>
    %26 = arith.subf %24, %25 : vector<1x128xf32>
    %27 = vector.extract_strided_slice %9 {offsets = [6, 0], sizes = [1, 128], strides = [1, 1]} : vector<8x128xf32> to vector<1x128xf32>
    %28 = arith.mulf %27, %12 : vector<1x128xf32>
    %29 = arith.mulf %18, %18 : vector<1x128xf32>
    %30 = arith.subf %28, %29 : vector<1x128xf32>
    %c0_6 = arith.constant 0 : index
    %c0_7 = arith.constant 0 : index
    %31 = vector.load %arg2[%c0_6, %c0_7] : memref<16x128xf32, #tpu.memory_space<vmem>>, vector<1x128xf32>
    %c1 = arith.constant 1 : index
    %c0_8 = arith.constant 0 : index
    %32 = vector.load %arg2[%c1, %c0_8] : memref<16x128xf32, #tpu.memory_space<vmem>>, vector<1x128xf32>
    %c2 = arith.constant 2 : index
    %c0_9 = arith.constant 0 : index
    %33 = vector.load %arg2[%c2, %c0_9] : memref<16x128xf32, #tpu.memory_space<vmem>>, vector<1x128xf32>
    %c3 = arith.constant 3 : index
    %c0_10 = arith.constant 0 : index
    %34 = vector.load %arg2[%c3, %c0_10] : memref<16x128xf32, #tpu.memory_space<vmem>>, vector<1x128xf32>
    %c4 = arith.constant 4 : index
    %c0_11 = arith.constant 0 : index
    %35 = vector.load %arg2[%c4, %c0_11] : memref<16x128xf32, #tpu.memory_space<vmem>>, vector<1x128xf32>
    %c5 = arith.constant 5 : index
    %c0_12 = arith.constant 0 : index
    %36 = vector.load %arg2[%c5, %c0_12] : memref<16x128xf32, #tpu.memory_space<vmem>>, vector<1x128xf32>
    %c6 = arith.constant 6 : index
    %c0_13 = arith.constant 0 : index
    %37 = vector.load %arg2[%c6, %c0_13] : memref<16x128xf32, #tpu.memory_space<vmem>>, vector<1x128xf32>
    %c7 = arith.constant 7 : index
    %c0_14 = arith.constant 0 : index
    %38 = vector.load %arg2[%c7, %c0_14] : memref<16x128xf32, #tpu.memory_space<vmem>>, vector<1x128xf32>
    %c8 = arith.constant 8 : index
    %c0_15 = arith.constant 0 : index
    %39 = vector.load %arg2[%c8, %c0_15] : memref<16x128xf32, #tpu.memory_space<vmem>>, vector<1x128xf32>
    %c9 = arith.constant 9 : index
    %c0_16 = arith.constant 0 : index
    %40 = vector.load %arg2[%c9, %c0_16] : memref<16x128xf32, #tpu.memory_space<vmem>>, vector<1x128xf32>
    %c10 = arith.constant 10 : index
    %c0_17 = arith.constant 0 : index
    %41 = vector.load %arg2[%c10, %c0_17] : memref<16x128xf32, #tpu.memory_space<vmem>>, vector<1x128xf32>
    %c11 = arith.constant 11 : index
    %c0_18 = arith.constant 0 : index
    %42 = vector.load %arg2[%c11, %c0_18] : memref<16x128xf32, #tpu.memory_space<vmem>>, vector<1x128xf32>
    %c12 = arith.constant 12 : index
    %c0_19 = arith.constant 0 : index
    %43 = vector.load %arg2[%c12, %c0_19] : memref<16x128xf32, #tpu.memory_space<vmem>>, vector<1x128xf32>
    %c13 = arith.constant 13 : index
    %c0_20 = arith.constant 0 : index
    %44 = vector.load %arg2[%c13, %c0_20] : memref<16x128xf32, #tpu.memory_space<vmem>>, vector<1x128xf32>
    %c14 = arith.constant 14 : index
    %c0_21 = arith.constant 0 : index
    %45 = vector.load %arg2[%c14, %c0_21] : memref<16x128xf32, #tpu.memory_space<vmem>>, vector<1x128xf32>
    %46 = arith.addf %36, %18 : vector<1x128xf32>
    %cst_22 = arith.constant 3.14159274 : f32
    %47 = vector.broadcast %cst_22 : f32 to vector<1x128xf32>
    %48 = arith.addf %46, %47 : vector<1x128xf32>
    %cst_23 = arith.constant 6.28318548 : f32
    %49 = vector.broadcast %cst_23 : f32 to vector<1x128xf32>
    %50 = arith.divf %48, %49 : vector<1x128xf32>
    %51 = math.floor %50 : vector<1x128xf32>
    %cst_24 = arith.constant 6.28318548 : f32
    %52 = vector.broadcast %cst_24 : f32 to vector<1x128xf32>
    %53 = arith.mulf %52, %51 : vector<1x128xf32>
    %54 = arith.subf %46, %53 : vector<1x128xf32>
    %cst_25 = arith.constant -3.14159274 : f32
    %55 = vector.broadcast %cst_25 : f32 to vector<1x128xf32>
    %56 = arith.cmpf ole, %54, %55 : vector<1x128xf32>
    %cst_26 = arith.constant 6.28318548 : f32
    %57 = vector.broadcast %cst_26 : f32 to vector<1x128xf32>
    %58 = arith.addf %54, %57 : vector<1x128xf32>
    %59 = arith.select %56, %58, %54 : vector<1x128xi1>, vector<1x128xf32>
    %60 = math.cos %59 : vector<1x128xf32>
    %61 = math.sin %59 : vector<1x128xf32>
    %62 = arith.mulf %60, %14 : vector<1x128xf32>
    %63 = arith.addf %34, %62 : vector<1x128xf32>
    %64 = arith.mulf %61, %16 : vector<1x128xf32>
    %65 = arith.subf %63, %64 : vector<1x128xf32>
    %66 = arith.mulf %61, %14 : vector<1x128xf32>
    %67 = arith.addf %35, %66 : vector<1x128xf32>
    %68 = arith.mulf %60, %16 : vector<1x128xf32>
    %69 = arith.addf %67, %68 : vector<1x128xf32>
    %70 = arith.addf %37, %22 : vector<1x128xf32>
    %71 = arith.addf %41, %26 : vector<1x128xf32>
    %72 = arith.addf %45, %30 : vector<1x128xf32>
    %73 = arith.mulf %71, %72 : vector<1x128xf32>
    %74 = arith.mulf %42, %44 : vector<1x128xf32>
    %75 = arith.subf %73, %74 : vector<1x128xf32>
    %76 = arith.mulf %40, %72 : vector<1x128xf32>
    %77 = arith.mulf %42, %43 : vector<1x128xf32>
    %78 = arith.subf %76, %77 : vector<1x128xf32>
    %cst_27 = arith.constant 0.000000e+00 : f32
    %79 = vector.broadcast %cst_27 : f32 to vector<1x128xf32>
    %80 = arith.subf %79, %78 : vector<1x128xf32>
    %81 = arith.mulf %40, %44 : vector<1x128xf32>
    %82 = arith.mulf %71, %43 : vector<1x128xf32>
    %83 = arith.subf %81, %82 : vector<1x128xf32>
    %84 = arith.mulf %38, %72 : vector<1x128xf32>
    %85 = arith.mulf %39, %44 : vector<1x128xf32>
    %86 = arith.subf %84, %85 : vector<1x128xf32>
    %cst_28 = arith.constant 0.000000e+00 : f32
    %87 = vector.broadcast %cst_28 : f32 to vector<1x128xf32>
    %88 = arith.subf %87, %86 : vector<1x128xf32>
    %89 = arith.mulf %70, %72 : vector<1x128xf32>
    %90 = arith.mulf %39, %43 : vector<1x128xf32>
    %91 = arith.subf %89, %90 : vector<1x128xf32>
    %92 = arith.mulf %70, %44 : vector<1x128xf32>
    %93 = arith.mulf %38, %43 : vector<1x128xf32>
    %94 = arith.subf %92, %93 : vector<1x128xf32>
    %cst_29 = arith.constant 0.000000e+00 : f32
    %95 = vector.broadcast %cst_29 : f32 to vector<1x128xf32>
    %96 = arith.subf %95, %94 : vector<1x128xf32>
    %97 = arith.mulf %38, %42 : vector<1x128xf32>
    %98 = arith.mulf %39, %71 : vector<1x128xf32>
    %99 = arith.subf %97, %98 : vector<1x128xf32>
    %100 = arith.mulf %70, %42 : vector<1x128xf32>
    %101 = arith.mulf %39, %40 : vector<1x128xf32>
    %102 = arith.subf %100, %101 : vector<1x128xf32>
    %cst_30 = arith.constant 0.000000e+00 : f32
    %103 = vector.broadcast %cst_30 : f32 to vector<1x128xf32>
    %104 = arith.subf %103, %102 : vector<1x128xf32>
    %105 = arith.mulf %70, %71 : vector<1x128xf32>
    %106 = arith.mulf %38, %40 : vector<1x128xf32>
    %107 = arith.subf %105, %106 : vector<1x128xf32>
    %108 = arith.mulf %70, %75 : vector<1x128xf32>
    %109 = arith.mulf %38, %80 : vector<1x128xf32>
    %110 = arith.addf %108, %109 : vector<1x128xf32>
    %111 = arith.mulf %39, %83 : vector<1x128xf32>
    %112 = arith.addf %110, %111 : vector<1x128xf32>
    %cst_31 = arith.constant 1.000000e+00 : f32
    %113 = vector.broadcast %cst_31 : f32 to vector<1x128xf32>
    %114 = arith.divf %113, %112 : vector<1x128xf32>
    %115 = arith.mulf %75, %114 : vector<1x128xf32>
    %116 = arith.mulf %88, %114 : vector<1x128xf32>
    %117 = arith.mulf %99, %114 : vector<1x128xf32>
    %118 = arith.mulf %80, %114 : vector<1x128xf32>
    %119 = arith.mulf %91, %114 : vector<1x128xf32>
    %120 = arith.mulf %104, %114 : vector<1x128xf32>
    %121 = arith.mulf %83, %114 : vector<1x128xf32>
    %122 = arith.mulf %96, %114 : vector<1x128xf32>
    %123 = arith.mulf %107, %114 : vector<1x128xf32>
    %124 = arith.mulf %37, %115 : vector<1x128xf32>
    %125 = arith.mulf %38, %118 : vector<1x128xf32>
    %126 = arith.addf %124, %125 : vector<1x128xf32>
    %127 = arith.mulf %39, %121 : vector<1x128xf32>
    %128 = arith.addf %126, %127 : vector<1x128xf32>
    %129 = arith.mulf %37, %116 : vector<1x128xf32>
    %130 = arith.mulf %38, %119 : vector<1x128xf32>
    %131 = arith.addf %129, %130 : vector<1x128xf32>
    %132 = arith.mulf %39, %122 : vector<1x128xf32>
    %133 = arith.addf %131, %132 : vector<1x128xf32>
    %134 = arith.mulf %37, %117 : vector<1x128xf32>
    %135 = arith.mulf %38, %120 : vector<1x128xf32>
    %136 = arith.addf %134, %135 : vector<1x128xf32>
    %137 = arith.mulf %39, %123 : vector<1x128xf32>
    %138 = arith.addf %136, %137 : vector<1x128xf32>
    %139 = arith.mulf %40, %115 : vector<1x128xf32>
    %140 = arith.mulf %41, %118 : vector<1x128xf32>
    %141 = arith.addf %139, %140 : vector<1x128xf32>
    %142 = arith.mulf %42, %121 : vector<1x128xf32>
    %143 = arith.addf %141, %142 : vector<1x128xf32>
    %144 = arith.mulf %40, %116 : vector<1x128xf32>
    %145 = arith.mulf %41, %119 : vector<1x128xf32>
    %146 = arith.addf %144, %145 : vector<1x128xf32>
    %147 = arith.mulf %42, %122 : vector<1x128xf32>
    %148 = arith.addf %146, %147 : vector<1x128xf32>
    %149 = arith.mulf %40, %117 : vector<1x128xf32>
    %150 = arith.mulf %41, %120 : vector<1x128xf32>
    %151 = arith.addf %149, %150 : vector<1x128xf32>
    %152 = arith.mulf %42, %123 : vector<1x128xf32>
    %153 = arith.addf %151, %152 : vector<1x128xf32>
    %154 = arith.mulf %43, %115 : vector<1x128xf32>
    %155 = arith.mulf %44, %118 : vector<1x128xf32>
    %156 = arith.addf %154, %155 : vector<1x128xf32>
    %157 = arith.mulf %45, %121 : vector<1x128xf32>
    %158 = arith.addf %156, %157 : vector<1x128xf32>
    %159 = arith.mulf %43, %116 : vector<1x128xf32>
    %160 = arith.mulf %44, %119 : vector<1x128xf32>
    %161 = arith.addf %159, %160 : vector<1x128xf32>
    %162 = arith.mulf %45, %122 : vector<1x128xf32>
    %163 = arith.addf %161, %162 : vector<1x128xf32>
    %164 = arith.mulf %43, %117 : vector<1x128xf32>
    %165 = arith.mulf %44, %120 : vector<1x128xf32>
    %166 = arith.addf %164, %165 : vector<1x128xf32>
    %167 = arith.mulf %45, %123 : vector<1x128xf32>
    %168 = arith.addf %166, %167 : vector<1x128xf32>
    %169 = arith.subf %65, %34 : vector<1x128xf32>
    %170 = arith.subf %69, %35 : vector<1x128xf32>
    %171 = arith.subf %59, %36 : vector<1x128xf32>
    %cst_32 = arith.constant 3.14159274 : f32
    %172 = vector.broadcast %cst_32 : f32 to vector<1x128xf32>
    %173 = arith.addf %171, %172 : vector<1x128xf32>
    %cst_33 = arith.constant 6.28318548 : f32
    %174 = vector.broadcast %cst_33 : f32 to vector<1x128xf32>
    %175 = arith.divf %173, %174 : vector<1x128xf32>
    %176 = math.floor %175 : vector<1x128xf32>
    %cst_34 = arith.constant 6.28318548 : f32
    %177 = vector.broadcast %cst_34 : f32 to vector<1x128xf32>
    %178 = arith.mulf %177, %176 : vector<1x128xf32>
    %179 = arith.subf %171, %178 : vector<1x128xf32>
    %cst_35 = arith.constant -3.14159274 : f32
    %180 = vector.broadcast %cst_35 : f32 to vector<1x128xf32>
    %181 = arith.cmpf ole, %179, %180 : vector<1x128xf32>
    %cst_36 = arith.constant 6.28318548 : f32
    %182 = vector.broadcast %cst_36 : f32 to vector<1x128xf32>
    %183 = arith.addf %179, %182 : vector<1x128xf32>
    %184 = arith.select %181, %183, %179 : vector<1x128xi1>, vector<1x128xf32>
    %185 = arith.mulf %128, %169 : vector<1x128xf32>
    %186 = arith.mulf %133, %170 : vector<1x128xf32>
    %187 = arith.addf %185, %186 : vector<1x128xf32>
    %188 = arith.mulf %138, %184 : vector<1x128xf32>
    %189 = arith.addf %187, %188 : vector<1x128xf32>
    %190 = arith.mulf %143, %169 : vector<1x128xf32>
    %191 = arith.mulf %148, %170 : vector<1x128xf32>
    %192 = arith.addf %190, %191 : vector<1x128xf32>
    %193 = arith.mulf %153, %184 : vector<1x128xf32>
    %194 = arith.addf %192, %193 : vector<1x128xf32>
    %195 = arith.mulf %158, %169 : vector<1x128xf32>
    %196 = arith.mulf %163, %170 : vector<1x128xf32>
    %197 = arith.addf %195, %196 : vector<1x128xf32>
    %198 = arith.mulf %168, %184 : vector<1x128xf32>
    %199 = arith.addf %197, %198 : vector<1x128xf32>
    %200 = arith.addf %34, %189 : vector<1x128xf32>
    %201 = arith.addf %35, %194 : vector<1x128xf32>
    %202 = arith.addf %36, %199 : vector<1x128xf32>
    %cst_37 = arith.constant 3.14159274 : f32
    %203 = vector.broadcast %cst_37 : f32 to vector<1x128xf32>
    %204 = arith.addf %202, %203 : vector<1x128xf32>
    %cst_38 = arith.constant 6.28318548 : f32
    %205 = vector.broadcast %cst_38 : f32 to vector<1x128xf32>
    %206 = arith.divf %204, %205 : vector<1x128xf32>
    %207 = math.floor %206 : vector<1x128xf32>
    %cst_39 = arith.constant 6.28318548 : f32
    %208 = vector.broadcast %cst_39 : f32 to vector<1x128xf32>
    %209 = arith.mulf %208, %207 : vector<1x128xf32>
    %210 = arith.subf %202, %209 : vector<1x128xf32>
    %cst_40 = arith.constant -3.14159274 : f32
    %211 = vector.broadcast %cst_40 : f32 to vector<1x128xf32>
    %212 = arith.cmpf ole, %210, %211 : vector<1x128xf32>
    %cst_41 = arith.constant 6.28318548 : f32
    %213 = vector.broadcast %cst_41 : f32 to vector<1x128xf32>
    %214 = arith.addf %210, %213 : vector<1x128xf32>
    %215 = arith.select %212, %214, %210 : vector<1x128xi1>, vector<1x128xf32>
    %cst_42 = arith.constant 1.000000e+00 : f32
    %216 = vector.broadcast %cst_42 : f32 to vector<1x128xf32>
    %217 = arith.subf %216, %128 : vector<1x128xf32>
    %cst_43 = arith.constant 0.000000e+00 : f32
    %218 = vector.broadcast %cst_43 : f32 to vector<1x128xf32>
    %219 = arith.subf %218, %133 : vector<1x128xf32>
    %cst_44 = arith.constant 0.000000e+00 : f32
    %220 = vector.broadcast %cst_44 : f32 to vector<1x128xf32>
    %221 = arith.subf %220, %138 : vector<1x128xf32>
    %cst_45 = arith.constant 0.000000e+00 : f32
    %222 = vector.broadcast %cst_45 : f32 to vector<1x128xf32>
    %223 = arith.subf %222, %143 : vector<1x128xf32>
    %cst_46 = arith.constant 1.000000e+00 : f32
    %224 = vector.broadcast %cst_46 : f32 to vector<1x128xf32>
    %225 = arith.subf %224, %148 : vector<1x128xf32>
    %cst_47 = arith.constant 0.000000e+00 : f32
    %226 = vector.broadcast %cst_47 : f32 to vector<1x128xf32>
    %227 = arith.subf %226, %153 : vector<1x128xf32>
    %cst_48 = arith.constant 0.000000e+00 : f32
    %228 = vector.broadcast %cst_48 : f32 to vector<1x128xf32>
    %229 = arith.subf %228, %158 : vector<1x128xf32>
    %cst_49 = arith.constant 0.000000e+00 : f32
    %230 = vector.broadcast %cst_49 : f32 to vector<1x128xf32>
    %231 = arith.subf %230, %163 : vector<1x128xf32>
    %cst_50 = arith.constant 1.000000e+00 : f32
    %232 = vector.broadcast %cst_50 : f32 to vector<1x128xf32>
    %233 = arith.subf %232, %168 : vector<1x128xf32>
    %234 = arith.mulf %217, %37 : vector<1x128xf32>
    %235 = arith.mulf %219, %40 : vector<1x128xf32>
    %236 = arith.addf %234, %235 : vector<1x128xf32>
    %237 = arith.mulf %221, %43 : vector<1x128xf32>
    %238 = arith.addf %236, %237 : vector<1x128xf32>
    %239 = arith.mulf %217, %38 : vector<1x128xf32>
    %240 = arith.mulf %219, %41 : vector<1x128xf32>
    %241 = arith.addf %239, %240 : vector<1x128xf32>
    %242 = arith.mulf %221, %44 : vector<1x128xf32>
    %243 = arith.addf %241, %242 : vector<1x128xf32>
    %244 = arith.mulf %217, %39 : vector<1x128xf32>
    %245 = arith.mulf %219, %42 : vector<1x128xf32>
    %246 = arith.addf %244, %245 : vector<1x128xf32>
    %247 = arith.mulf %221, %45 : vector<1x128xf32>
    %248 = arith.addf %246, %247 : vector<1x128xf32>
    %249 = arith.mulf %223, %37 : vector<1x128xf32>
    %250 = arith.mulf %225, %40 : vector<1x128xf32>
    %251 = arith.addf %249, %250 : vector<1x128xf32>
    %252 = arith.mulf %227, %43 : vector<1x128xf32>
    %253 = arith.addf %251, %252 : vector<1x128xf32>
    %254 = arith.mulf %223, %38 : vector<1x128xf32>
    %255 = arith.mulf %225, %41 : vector<1x128xf32>
    %256 = arith.addf %254, %255 : vector<1x128xf32>
    %257 = arith.mulf %227, %44 : vector<1x128xf32>
    %258 = arith.addf %256, %257 : vector<1x128xf32>
    %259 = arith.mulf %223, %39 : vector<1x128xf32>
    %260 = arith.mulf %225, %42 : vector<1x128xf32>
    %261 = arith.addf %259, %260 : vector<1x128xf32>
    %262 = arith.mulf %227, %45 : vector<1x128xf32>
    %263 = arith.addf %261, %262 : vector<1x128xf32>
    %264 = arith.mulf %229, %37 : vector<1x128xf32>
    %265 = arith.mulf %231, %40 : vector<1x128xf32>
    %266 = arith.addf %264, %265 : vector<1x128xf32>
    %267 = arith.mulf %233, %43 : vector<1x128xf32>
    %268 = arith.addf %266, %267 : vector<1x128xf32>
    %269 = arith.mulf %229, %38 : vector<1x128xf32>
    %270 = arith.mulf %231, %41 : vector<1x128xf32>
    %271 = arith.addf %269, %270 : vector<1x128xf32>
    %272 = arith.mulf %233, %44 : vector<1x128xf32>
    %273 = arith.addf %271, %272 : vector<1x128xf32>
    %274 = arith.mulf %229, %39 : vector<1x128xf32>
    %275 = arith.mulf %231, %42 : vector<1x128xf32>
    %276 = arith.addf %274, %275 : vector<1x128xf32>
    %277 = arith.mulf %233, %45 : vector<1x128xf32>
    %278 = arith.addf %276, %277 : vector<1x128xf32>
    %279 = arith.subf %31, %200 : vector<1x128xf32>
    %280 = arith.subf %32, %201 : vector<1x128xf32>
    %281 = arith.subf %33, %215 : vector<1x128xf32>
    %cst_51 = arith.constant 3.14159274 : f32
    %282 = vector.broadcast %cst_51 : f32 to vector<1x128xf32>
    %283 = arith.addf %281, %282 : vector<1x128xf32>
    %cst_52 = arith.constant 6.28318548 : f32
    %284 = vector.broadcast %cst_52 : f32 to vector<1x128xf32>
    %285 = arith.divf %283, %284 : vector<1x128xf32>
    %286 = math.floor %285 : vector<1x128xf32>
    %cst_53 = arith.constant 6.28318548 : f32
    %287 = vector.broadcast %cst_53 : f32 to vector<1x128xf32>
    %288 = arith.mulf %287, %286 : vector<1x128xf32>
    %289 = arith.subf %281, %288 : vector<1x128xf32>
    %cst_54 = arith.constant -3.14159274 : f32
    %290 = vector.broadcast %cst_54 : f32 to vector<1x128xf32>
    %291 = arith.cmpf ole, %289, %290 : vector<1x128xf32>
    %cst_55 = arith.constant 6.28318548 : f32
    %292 = vector.broadcast %cst_55 : f32 to vector<1x128xf32>
    %293 = arith.addf %289, %292 : vector<1x128xf32>
    %294 = arith.select %291, %293, %289 : vector<1x128xi1>, vector<1x128xf32>
    %295 = arith.mulf %258, %278 : vector<1x128xf32>
    %296 = arith.mulf %263, %273 : vector<1x128xf32>
    %297 = arith.subf %295, %296 : vector<1x128xf32>
    %298 = arith.mulf %253, %278 : vector<1x128xf32>
    %299 = arith.mulf %263, %268 : vector<1x128xf32>
    %300 = arith.subf %298, %299 : vector<1x128xf32>
    %cst_56 = arith.constant 0.000000e+00 : f32
    %301 = vector.broadcast %cst_56 : f32 to vector<1x128xf32>
    %302 = arith.subf %301, %300 : vector<1x128xf32>
    %303 = arith.mulf %253, %273 : vector<1x128xf32>
    %304 = arith.mulf %258, %268 : vector<1x128xf32>
    %305 = arith.subf %303, %304 : vector<1x128xf32>
    %306 = arith.mulf %243, %278 : vector<1x128xf32>
    %307 = arith.mulf %248, %273 : vector<1x128xf32>
    %308 = arith.subf %306, %307 : vector<1x128xf32>
    %cst_57 = arith.constant 0.000000e+00 : f32
    %309 = vector.broadcast %cst_57 : f32 to vector<1x128xf32>
    %310 = arith.subf %309, %308 : vector<1x128xf32>
    %311 = arith.mulf %238, %278 : vector<1x128xf32>
    %312 = arith.mulf %248, %268 : vector<1x128xf32>
    %313 = arith.subf %311, %312 : vector<1x128xf32>
    %314 = arith.mulf %238, %273 : vector<1x128xf32>
    %315 = arith.mulf %243, %268 : vector<1x128xf32>
    %316 = arith.subf %314, %315 : vector<1x128xf32>
    %cst_58 = arith.constant 0.000000e+00 : f32
    %317 = vector.broadcast %cst_58 : f32 to vector<1x128xf32>
    %318 = arith.subf %317, %316 : vector<1x128xf32>
    %319 = arith.mulf %243, %263 : vector<1x128xf32>
    %320 = arith.mulf %248, %258 : vector<1x128xf32>
    %321 = arith.subf %319, %320 : vector<1x128xf32>
    %322 = arith.mulf %238, %263 : vector<1x128xf32>
    %323 = arith.mulf %248, %253 : vector<1x128xf32>
    %324 = arith.subf %322, %323 : vector<1x128xf32>
    %cst_59 = arith.constant 0.000000e+00 : f32
    %325 = vector.broadcast %cst_59 : f32 to vector<1x128xf32>
    %326 = arith.subf %325, %324 : vector<1x128xf32>
    %327 = arith.mulf %238, %258 : vector<1x128xf32>
    %328 = arith.mulf %243, %253 : vector<1x128xf32>
    %329 = arith.subf %327, %328 : vector<1x128xf32>
    %330 = arith.mulf %238, %297 : vector<1x128xf32>
    %331 = arith.mulf %243, %302 : vector<1x128xf32>
    %332 = arith.addf %330, %331 : vector<1x128xf32>
    %333 = arith.mulf %248, %305 : vector<1x128xf32>
    %334 = arith.addf %332, %333 : vector<1x128xf32>
    %cst_60 = arith.constant 1.000000e+00 : f32
    %335 = vector.broadcast %cst_60 : f32 to vector<1x128xf32>
    %336 = arith.divf %335, %334 : vector<1x128xf32>
    %337 = arith.mulf %297, %336 : vector<1x128xf32>
    %338 = arith.mulf %310, %336 : vector<1x128xf32>
    %339 = arith.mulf %321, %336 : vector<1x128xf32>
    %340 = arith.mulf %302, %336 : vector<1x128xf32>
    %341 = arith.mulf %313, %336 : vector<1x128xf32>
    %342 = arith.mulf %326, %336 : vector<1x128xf32>
    %343 = arith.mulf %305, %336 : vector<1x128xf32>
    %344 = arith.mulf %318, %336 : vector<1x128xf32>
    %345 = arith.mulf %329, %336 : vector<1x128xf32>
    %346 = arith.mulf %337, %279 : vector<1x128xf32>
    %347 = arith.mulf %338, %280 : vector<1x128xf32>
    %348 = arith.addf %346, %347 : vector<1x128xf32>
    %349 = arith.mulf %339, %294 : vector<1x128xf32>
    %350 = arith.addf %348, %349 : vector<1x128xf32>
    %351 = arith.mulf %340, %279 : vector<1x128xf32>
    %352 = arith.mulf %341, %280 : vector<1x128xf32>
    %353 = arith.addf %351, %352 : vector<1x128xf32>
    %354 = arith.mulf %342, %294 : vector<1x128xf32>
    %355 = arith.addf %353, %354 : vector<1x128xf32>
    %356 = arith.mulf %343, %279 : vector<1x128xf32>
    %357 = arith.mulf %344, %280 : vector<1x128xf32>
    %358 = arith.addf %356, %357 : vector<1x128xf32>
    %359 = arith.mulf %345, %294 : vector<1x128xf32>
    %360 = arith.addf %358, %359 : vector<1x128xf32>
    %361 = arith.mulf %279, %350 : vector<1x128xf32>
    %362 = arith.mulf %280, %355 : vector<1x128xf32>
    %363 = arith.addf %361, %362 : vector<1x128xf32>
    %364 = arith.mulf %294, %360 : vector<1x128xf32>
    %365 = arith.addf %363, %364 : vector<1x128xf32>
    %366 = arith.mulf %258, %278 : vector<1x128xf32>
    %367 = arith.mulf %263, %273 : vector<1x128xf32>
    %368 = arith.subf %366, %367 : vector<1x128xf32>
    %369 = arith.mulf %238, %368 : vector<1x128xf32>
    %370 = arith.mulf %253, %278 : vector<1x128xf32>
    %371 = arith.mulf %263, %268 : vector<1x128xf32>
    %372 = arith.subf %370, %371 : vector<1x128xf32>
    %373 = arith.mulf %243, %372 : vector<1x128xf32>
    %374 = arith.subf %369, %373 : vector<1x128xf32>
    %375 = arith.mulf %253, %273 : vector<1x128xf32>
    %376 = arith.mulf %258, %268 : vector<1x128xf32>
    %377 = arith.subf %375, %376 : vector<1x128xf32>
    %378 = arith.mulf %248, %377 : vector<1x128xf32>
    %379 = arith.addf %374, %378 : vector<1x128xf32>
    %cst_61 = arith.constant 1.000000e-01 : f32
    %380 = vector.broadcast %cst_61 : f32 to vector<1x128xf32>
    %381 = arith.mulf %380, %379 : vector<1x128xf32>
    %382 = arith.addf %365, %381 : vector<1x128xf32>
    %c0_62 = arith.constant 0 : index
    %c0_63 = arith.constant 0 : index
    %383 = vector.load %arg4[%c0_62, %c0_63] : memref<16x128xf32, #tpu.memory_space<vmem>>, vector<1x128xf32>
    tpu.vector_store %arg4[%c0_62, %c0_63], %382 {strides = array<i32>} : memref<16x128xf32, #tpu.memory_space<vmem>>, vector<1x128xf32>,
    %c1_64 = arith.constant 1 : index
    %c0_65 = arith.constant 0 : index
    %384 = vector.load %arg4[%c1_64, %c0_65] : memref<16x128xf32, #tpu.memory_space<vmem>>, vector<1x128xf32>
    tpu.vector_store %arg4[%c1_64, %c0_65], %200 {strides = array<i32>} : memref<16x128xf32, #tpu.memory_space<vmem>>, vector<1x128xf32>,
    %c2_66 = arith.constant 2 : index
    %c0_67 = arith.constant 0 : index
    %385 = vector.load %arg4[%c2_66, %c0_67] : memref<16x128xf32, #tpu.memory_space<vmem>>, vector<1x128xf32>
    tpu.vector_store %arg4[%c2_66, %c0_67], %201 {strides = array<i32>} : memref<16x128xf32, #tpu.memory_space<vmem>>, vector<1x128xf32>,
    %c3_68 = arith.constant 3 : index
    %c0_69 = arith.constant 0 : index
    %386 = vector.load %arg4[%c3_68, %c0_69] : memref<16x128xf32, #tpu.memory_space<vmem>>, vector<1x128xf32>
    tpu.vector_store %arg4[%c3_68, %c0_69], %215 {strides = array<i32>} : memref<16x128xf32, #tpu.memory_space<vmem>>, vector<1x128xf32>,
    %c4_70 = arith.constant 4 : index
    %c0_71 = arith.constant 0 : index
    %387 = vector.load %arg4[%c4_70, %c0_71] : memref<16x128xf32, #tpu.memory_space<vmem>>, vector<1x128xf32>
    tpu.vector_store %arg4[%c4_70, %c0_71], %238 {strides = array<i32>} : memref<16x128xf32, #tpu.memory_space<vmem>>, vector<1x128xf32>,
    %c5_72 = arith.constant 5 : index
    %c0_73 = arith.constant 0 : index
    %388 = vector.load %arg4[%c5_72, %c0_73] : memref<16x128xf32, #tpu.memory_space<vmem>>, vector<1x128xf32>
    tpu.vector_store %arg4[%c5_72, %c0_73], %243 {strides = array<i32>} : memref<16x128xf32, #tpu.memory_space<vmem>>, vector<1x128xf32>,
    %c6_74 = arith.constant 6 : index
    %c0_75 = arith.constant 0 : index
    %389 = vector.load %arg4[%c6_74, %c0_75] : memref<16x128xf32, #tpu.memory_space<vmem>>, vector<1x128xf32>
    tpu.vector_store %arg4[%c6_74, %c0_75], %248 {strides = array<i32>} : memref<16x128xf32, #tpu.memory_space<vmem>>, vector<1x128xf32>,
    %c7_76 = arith.constant 7 : index
    %c0_77 = arith.constant 0 : index
    %390 = vector.load %arg4[%c7_76, %c0_77] : memref<16x128xf32, #tpu.memory_space<vmem>>, vector<1x128xf32>
    tpu.vector_store %arg4[%c7_76, %c0_77], %253 {strides = array<i32>} : memref<16x128xf32, #tpu.memory_space<vmem>>, vector<1x128xf32>,
    %c8_78 = arith.constant 8 : index
    %c0_79 = arith.constant 0 : index
    %391 = vector.load %arg4[%c8_78, %c0_79] : memref<16x128xf32, #tpu.memory_space<vmem>>, vector<1x128xf32>
    tpu.vector_store %arg4[%c8_78, %c0_79], %258 {strides = array<i32>} : memref<16x128xf32, #tpu.memory_space<vmem>>, vector<1x128xf32>,
    %c9_80 = arith.constant 9 : index
    %c0_81 = arith.constant 0 : index
    %392 = vector.load %arg4[%c9_80, %c0_81] : memref<16x128xf32, #tpu.memory_space<vmem>>, vector<1x128xf32>
    tpu.vector_store %arg4[%c9_80, %c0_81], %263 {strides = array<i32>} : memref<16x128xf32, #tpu.memory_space<vmem>>, vector<1x128xf32>,
    %c10_82 = arith.constant 10 : index
    %c0_83 = arith.constant 0 : index
    %393 = vector.load %arg4[%c10_82, %c0_83] : memref<16x128xf32, #tpu.memory_space<vmem>>, vector<1x128xf32>
    tpu.vector_store %arg4[%c10_82, %c0_83], %268 {strides = array<i32>} : memref<16x128xf32, #tpu.memory_space<vmem>>, vector<1x128xf32>,
    %c11_84 = arith.constant 11 : index
    %c0_85 = arith.constant 0 : index
    %394 = vector.load %arg4[%c11_84, %c0_85] : memref<16x128xf32, #tpu.memory_space<vmem>>, vector<1x128xf32>
    tpu.vector_store %arg4[%c11_84, %c0_85], %273 {strides = array<i32>} : memref<16x128xf32, #tpu.memory_space<vmem>>, vector<1x128xf32>,
    %c12_86 = arith.constant 12 : index
    %c0_87 = arith.constant 0 : index
    %395 = vector.load %arg4[%c12_86, %c0_87] : memref<16x128xf32, #tpu.memory_space<vmem>>, vector<1x128xf32>
    tpu.vector_store %arg4[%c12_86, %c0_87], %278 {strides = array<i32>} : memref<16x128xf32, #tpu.memory_space<vmem>>, vector<1x128xf32>,
    %cst_88 = arith.constant 0.000000e+00 : f32
    %396 = vector.broadcast %cst_88 : f32 to vector<3x128xf32>
    %c13_89 = arith.constant 13 : index
    %c0_90 = arith.constant 0 : index
    %397 = vector.load %arg4[%c13_89, %c0_90] : memref<16x128xf32, #tpu.memory_space<vmem>>, vector<3x128xf32>
    tpu.vector_store %arg4[%c13_89, %c0_90], %396 {strides = array<i32>} : memref<16x128xf32, #tpu.memory_space<vmem>>, vector<3x128xf32>,
    return
  }
  func.func @transform_0(%arg0: i32) -> (i32, i32) {
    %c0_i32 = arith.constant 0 : i32
    %c0_i32_0 = arith.constant 0 : i32
    return %c0_i32, %arg0 : i32, i32
  }
  func.func @transform_1(%arg0: i32) -> (i32, i32) {
    %c0_i32 = arith.constant 0 : i32
    %c0_i32_0 = arith.constant 0 : i32
    return %c0_i32, %arg0 : i32, i32
  }
  func.func @transform_2(%arg0: i32) -> (i32, i32) {
    %c0_i32 = arith.constant 0 : i32
    %c0_i32_0 = arith.constant 0 : i32
    %c0_i32_1 = arith.constant 0 : i32
    return %c0_i32, %c0_i32_0 : i32, i32
  }
  func.func @transform_3(%arg0: i32) -> (i32, i32) {
    %c0_i32 = arith.constant 0 : i32
    %c0_i32_0 = arith.constant 0 : i32
    return %c0_i32, %arg0 : i32, i32
  }
}

</mosaic_0001>

<llo_original>
// kernel: tpu_custom_call.1
$region0: #{tpu_custom_call.1}
  #allocation0 [shape = 'u32[]', space=smem, size = 0x4, offset = 0x4, fixed_abs, tag = 'smem constant byte address 0x4 - core index']
  #allocation1 [shape = 'u32[144,128]{1,0:T(1,128)}', space=vmem, size = 0x12000, scoped, tag = 'internal scratch']
  %s0 = inlined_call_operand.hbm [shape: f32[512,256], index: 0, kind: input, shape index: {}]
  %s1 = inlined_call_operand.hbm [shape: f32[16,256], index: 1, kind: input, shape index: {}]
  %s2 = inlined_call_operand.hbm [shape: f32[8,512], index: 2, kind: input, shape index: {}]
  %s3 = inlined_call_operand.hbm [shape: f32[16,256], index: 3, kind: output, shape index: {}]
  %s4 = sld [smem:[#allocation0]]
  $region57: #{tpu_custom_call.1} parent=0
    _
  %s6 = ssub.s32 1, %s4
  %s7 = scalar_select 0, %s6, %s4
  $region1: #{tpu_custom_call.1} parent=0
    #allocation2 [shape = 'u8[524288]{0}', space=vmem, size = 0x80000, scoped, tag = 'input window, operand 0']
    #allocation3 [shape = 's32[2]{0}', space=sflag, size = 0x8, scoped, tag = 'scoped memory for tpu_custom_call.1']
    #allocation4 [shape = 's32[2]{0}', space=sflag, size = 0x8, scoped, tag = 'scoped memory for tpu_custom_call.1']
    #allocation5 [shape = 'u8[16384]{0}', space=vmem, size = 0x4000, scoped, tag = 'input window, operand 1']
    #allocation6 [shape = 's32[2]{0}', space=sflag, size = 0x8, scoped, tag = 'scoped memory for tpu_custom_call.1']
    #allocation7 [shape = 'u8[16384]{0}', space=vmem, size = 0x4000, scoped, tag = 'input window, operand 2, single buffered']
    #allocation8 [shape = 'u8[16384]{0}', space=vmem, size = 0x4000, scoped, tag = 'output window, operand 0']
    %8 = vsyncpa [#allocation3], 0
    %s9 = scalar_lea.sflag [#allocation3], 1
    %10 = vsyncpa %s9, 0
    %11 = vsyncpa [#allocation6], 0
    %s12 = scalar_lea.sflag [#allocation6], 1
    %13 = vsyncpa %s12, 0
    %14 = vsyncpa [#allocation4], 0
    %s15 = scalar_lea.sflag [#allocation4], 1
    %16 = vsyncpa %s15, 0
    loop: start=0, step=1, limit=4
    $region2: #{tpu_custom_call.1} parent=1 // loop_pre_header
      _
    $region3: #{tpu_custom_call.1} parent=1 // loop_header
      %s18 = sphi 0, %s22
      %p19 = scmp.ge.s32.totalorder %s18, 4
      %s28 = sphi 0, %s30
      %s31 = sphi 0, %s28
      %s32 = sphi 0, %s31
      %s48 = sphi 0, %s32
      %s54 = sphi 0, %s56
      %s57 = sphi 0, %s54
      %s58 = sphi 0, %s57
      %s74 = sphi 0, %s58
      %s78 = sphi 0, %s78
      %s80 = sphi 0, %s78
      %s81 = sphi 0, %s80
      %s95 = sphi 0, %s81
      %s101 = sphi 0, %s103
      %s104 = sphi 0, %s101
      %s105 = sphi 0, %s104
      %s121 = sphi 0, %s105
    $region4: #{tpu_custom_call.1} parent=1 // loop_header_branch
      %21 = sbr.rel (%p19) target = $region8
    $region5: #{tpu_custom_call.1} parent=1 // loop_body
      %s23 = ssub.s32 %s18, 1
      %s24 = ssub.s32 %s18, 2
      %s25 = sadd.s32 %s18, 1
      %s26 = ssub.s32 %s18, %s25
      %p27 = scmp.eq.s32.totalorder %s26, 0
      %s29 = sadd.s32 %s28, 1
      %s30 = scalar_select %p27, %s28, %s29
      %p33 = pneg %p27
      %p34 = scmp.eq.s32.totalorder %s18, 1
      %p35 = por %p33, %p34
      %p36 = scmp.ne.s32.totalorder %s28, %s31
      %p37 = scmp.eq.s32.totalorder %s18, 0
      %p38 = por %p36, %p37
      %p39 = scmp.ne.s32.totalorder %s28, %s31
      %p40 = scmp.eq.s32.totalorder %s23, 1
      %p41 = por %p39, %p40
      %p42 = scmp.ne.s32.totalorder %s31, %s32
      %p43 = scmp.eq.s32.totalorder %s23, 0
      %p44 = por %p42, %p43
      %p45 = scmp.ne.s32.totalorder %s31, %s32
      %p46 = scmp.eq.s32.totalorder %s24, 1
      %p47 = por %p45, %p46
      %p49 = scmp.ne.s32.totalorder %s32, %s48
      %p50 = scmp.eq.s32.totalorder %s24, 0
      %p51 = por %p49, %p50
      %s52 = ssub.s32 %s18, %s25
      %p53 = scmp.eq.s32.totalorder %s52, 0
      %s55 = sadd.s32 %s54, 1
      %s56 = scalar_select %p53, %s54, %s55
      %p59 = pneg %p53
      %p60 = scmp.eq.s32.totalorder %s18, 1
      %p61 = por %p59, %p60
      %p62 = scmp.ne.s32.totalorder %s54, %s57
      %p63 = scmp.eq.s32.totalorder %s18, 0
      %p64 = por %p62, %p63
      %p65 = scmp.ne.s32.totalorder %s54, %s57
      %p66 = scmp.eq.s32.totalorder %s23, 1
      %p67 = por %p65, %p66
      %p68 = scmp.ne.s32.totalorder %s57, %s58
      %p69 = scmp.eq.s32.totalorder %s23, 0
      %p70 = por %p68, %p69
      %p71 = scmp.ne.s32.totalorder %s57, %s58
      %p72 = scmp.eq.s32.totalorder %s24, 1
      %p73 = por %p71, %p72
      %p75 = scmp.ne.s32.totalorder %s58, %s74
      %p76 = scmp.eq.s32.totalorder %s24, 0
      %p77 = por %p75, %p76
      %s79 = sadd.s32 %s78, 1
      %p82 = scmp.eq.s32.totalorder %s18, 1
      %p83 = scmp.ne.s32.totalorder %s78, %s80
      %p84 = scmp.eq.s32.totalorder %s18, 0
      %p85 = por %p83, %p84
      %p86 = scmp.ne.s32.totalorder %s78, %s80
      %p87 = scmp.eq.s32.totalorder %s23, 1
      %p88 = por %p86, %p87
      %p89 = scmp.ne.s32.totalorder %s80, %s81
      %p90 = scmp.eq.s32.totalorder %s23, 0
      %p91 = por %p89, %p90
      %p92 = scmp.ne.s32.totalorder %s80, %s81
      %p93 = scmp.eq.s32.totalorder %s24, 1
      %p94 = por %p92, %p93
      %p96 = scmp.ne.s32.totalorder %s81, %s95
      %p97 = scmp.eq.s32.totalorder %s24, 0
      %p98 = por %p96, %p97
      %s99 = ssub.s32 %s18, %s25
      %p100 = scmp.eq.s32.totalorder %s99, 0
      %s102 = sadd.s32 %s101, 1
      %s103 = scalar_select %p100, %s101, %s102
      %p106 = pneg %p100
      %p107 = scmp.eq.s32.totalorder %s18, 1
      %p108 = por %p106, %p107
      %p109 = scmp.ne.s32.totalorder %s101, %s104
      %p110 = scmp.eq.s32.totalorder %s18, 0
      %p111 = por %p109, %p110
      %p112 = scmp.ne.s32.totalorder %s101, %s104
      %p113 = scmp.eq.s32.totalorder %s23, 1
      %p114 = por %p112, %p113
      %p115 = scmp.ne.s32.totalorder %s104, %s105
      %p116 = scmp.eq.s32.totalorder %s23, 0
      %p117 = por %p115, %p116
      %p118 = scmp.ne.s32.totalorder %s104, %s105
      %p119 = scmp.eq.s32.totalorder %s24, 1
      %p120 = por %p118, %p119
      %p122 = scmp.ne.s32.totalorder %s105, %s121
      %p123 = scmp.eq.s32.totalorder %s24, 0
      %p124 = por %p122, %p123
      %p125 = scmp.le.s32.totalorder 1, %s18
      %p126 = scmp.lt.s32.totalorder %s18, 3
      %p127 = pnand %p125, %p126
      %p128 = pneg %p127
      // Predicated region
      $region9: #{tpu_custom_call.1} parent=5 // pred_check
        _
      $region10: #{tpu_custom_call.1} parent=5 // pred_check_branch
        %130 = sbr.rel (%p127) target = $region12
      $region11: #{tpu_custom_call.1} parent=5 // pred_region
        %s131 = ssub.s32 %s18, 1
        // Predicated region
        $region13: #{tpu_custom_call.1} parent=11 // pred_check
          %p132 = pneg %p91
        $region14: #{tpu_custom_call.1} parent=11 // pred_check_branch
          %134 = sbr.rel (%p132) target = $region16
        $region15: #{tpu_custom_call.1} parent=11 // pred_region
          %s136 = ssub.s32 512, 512
          %137 = vsyncadd [#allocation6], %s136
          %s139 = sshll.u32 [#allocation7], 4
          %s140 = int_to_ptr.vmem [resolvable:$true] %s139
          %142 = dma.hbm_to_vmem [thread:$0]  %s2, 512, %s140, [#allocation6]
        $region16: #{tpu_custom_call.1} parent=11 // pred_fallthru
          _
      $region12: #{tpu_custom_call.1} parent=5 // pred_fallthru
        _
      %p143 = scmp.lt.s32.totalorder %s18, 2
      // Predicated region
      $region17: #{tpu_custom_call.1} parent=5 // pred_check
        %p144 = pneg %p143
      $region18: #{tpu_custom_call.1} parent=5 // pred_check_branch
        %146 = sbr.rel (%p144) target = $region20
      $region19: #{tpu_custom_call.1} parent=5 // pred_region
        // Predicated region
        $region21: #{tpu_custom_call.1} parent=19 // pred_check
          %p147 = pneg %p38
        $region22: #{tpu_custom_call.1} parent=19 // pred_check_branch
          %149 = sbr.rel (%p147) target = $region24
        $region23: #{tpu_custom_call.1} parent=19 // pred_region
          %s150 = sand.u32 %s28, 1
          %s151 = scalar_lea.sflag [#allocation3], %s150
          %s152 = sand.u32 %s28, 1
          %s153 = smul.addr %s152, 512
          %s154 = scalar_lea.vmem [#allocation2], %s153
          %s156 = ssub.s32 8192, 8192
          %157 = vsyncadd %s151, %s156
          %s158 = smul.addr %s18, 128
          %s159 = scalar_lea.hbm %s0, %s158
          %s160 = sshll.u32 %s154, 4
          %s161 = int_to_ptr.vmem [resolvable:$true] %s160
          %166 = dma.hbm_to_vmem [thread:$0]  %s159, 8192, %s161, %s151, 256, 128, 8
        $region24: #{tpu_custom_call.1} parent=19 // pred_fallthru
          _
        // Predicated region
        $region25: #{tpu_custom_call.1} parent=19 // pred_check
          %p167 = pneg %p64
        $region26: #{tpu_custom_call.1} parent=19 // pred_check_branch
          %169 = sbr.rel (%p167) target = $region28
        $region27: #{tpu_custom_call.1} parent=19 // pred_region
          %s170 = sand.u32 %s18, 1
          %s171 = scalar_lea.sflag [#allocation6], %s170
          %s172 = sand.u32 %s54, 1
          %s173 = smul.addr %s172, 16
          %s174 = scalar_lea.vmem [#allocation5], %s173
          %s176 = ssub.s32 256, 256
          %177 = vsyncadd %s171, %s176
          %s178 = smul.addr %s18, 128
          %s179 = scalar_lea.hbm %s1, %s178
          %s180 = sshll.u32 %s174, 4
          %s181 = int_to_ptr.vmem [resolvable:$true] %s180
          %186 = dma.hbm_to_vmem [thread:$0]  %s179, 256, %s181, %s171, 256, 128, 8
        $region28: #{tpu_custom_call.1} parent=19 // pred_fallthru
          _
      $region20: #{tpu_custom_call.1} parent=5 // pred_fallthru
        _
      %p187 = scmp.le.s32.totalorder 1, %s18
      %p188 = scmp.lt.s32.totalorder %s18, 3
      %p189 = pnand %p187, %p188
      %p190 = pneg %p189
      // Predicated region
      $region29: #{tpu_custom_call.1} parent=5 // pred_check
        _
      $region30: #{tpu_custom_call.1} parent=5 // pred_check_branch
        %192 = sbr.rel (%p189) target = $region32
      $region31: #{tpu_custom_call.1} parent=5 // pred_region
        %s193 = ssub.s32 %s18, 1
        %s194 = sand.u32 %s31, 1
        %s195 = scalar_lea.sflag [#allocation3], %s194
        %s196 = sand.u32 %s31, 1
        %s197 = smul.addr %s196, 512
        %s198 = scalar_lea.vmem [#allocation2], %s197
        // Predicated region
        $region33: #{tpu_custom_call.1} parent=31 // pred_check
          %p199 = pneg %p44
        $region34: #{tpu_custom_call.1} parent=31 // pred_check_branch
          %201 = sbr.rel (%p199) target = $region36
        $region35: #{tpu_custom_call.1} parent=31 // pred_region
          %202 = dma.done %s195, 8192
        $region36: #{tpu_custom_call.1} parent=31 // pred_fallthru
          _
        %s203 = sand.u32 %s23, 1
        %s204 = scalar_lea.sflag [#allocation6], %s203
        %s205 = sand.u32 %s57, 1
        %s206 = smul.addr %s205, 16
        %s207 = scalar_lea.vmem [#allocation5], %s206
        // Predicated region
        $region37: #{tpu_custom_call.1} parent=31 // pred_check
          %p208 = pneg %p70
        $region38: #{tpu_custom_call.1} parent=31 // pred_check_branch
          %210 = sbr.rel (%p208) target = $region40
        $region39: #{tpu_custom_call.1} parent=31 // pred_region
          %211 = dma.done %s204, 256
        $region40: #{tpu_custom_call.1} parent=31 // pred_fallthru
          _
        // Predicated region
        $region41: #{tpu_custom_call.1} parent=31 // pred_check
          %p212 = pneg %p91
        $region42: #{tpu_custom_call.1} parent=31 // pred_check_branch
          %214 = sbr.rel (%p212) target = $region44
        $region43: #{tpu_custom_call.1} parent=31 // pred_region
          %215 = dma.done [#allocation6], 512
        $region44: #{tpu_custom_call.1} parent=31 // pred_fallthru
          _
        %s216 = sand.u32 %s31, 1
        %s217 = scalar_lea.sflag [#allocation3], %s216
        %s218 = sand.u32 %s31, 1
        %s219 = smul.addr %s218, 512
        %s220 = scalar_lea.vmem [#allocation2], %s219
        %p221 = pneg %p44
        %p222 = pneg %p41
        %s223 = sand.u32 %s23, 1
        %s224 = scalar_lea.sflag [#allocation6], %s223
        %s225 = sand.u32 %s57, 1
        %s226 = smul.addr %s225, 16
        %s227 = scalar_lea.vmem [#allocation5], %s226
        %p228 = pneg %p70
        %p229 = pneg %p67
        %p230 = pneg %p91
        %p231 = pneg %p88
        %p232 = pneg %p117
        %p233 = pneg %p114
        %s234 = sand.u32 %s104, 1
        %s235 = scalar_lea.sflag [#allocation4], %s234
        %s236 = sand.u32 %s104, 1
        %s237 = smul.addr %s236, 16
        %s238 = scalar_lea.vmem [#allocation8], %s237
        %v239 = vld [vmem:[%s198] sm:$0xff]
        %v240 = vld [vmem:[%s198 + $0x8] sm:$0xff]
        %v241 = vld [vmem:[%s198 + $0x10] sm:$0xff]
        %v242 = vld [vmem:[%s198 + $0x18] sm:$0xff]
        %v243 = vld [vmem:[%s198 + $0x20] sm:$0xff]
        %v244 = vld [vmem:[%s198 + $0x28] sm:$0xff]
        %v245 = vld [vmem:[%s198 + $0x30] sm:$0xff]
        %v246 = vld [vmem:[%s198 + $0x38] sm:$0xff]
        %v247 = vld [vmem:[%s198 + $0x40] sm:$0xff]
        %v248 = vld [vmem:[%s198 + $0x48] sm:$0xff]
        %v249 = vld [vmem:[%s198 + $0x50] sm:$0xff]
        %v250 = vld [vmem:[%s198 + $0x58] sm:$0xff]
        %v251 = vld [vmem:[%s198 + $0x60] sm:$0xff]
        %v252 = vld [vmem:[%s198 + $0x68] sm:$0xff]
        %v253 = vld [vmem:[%s198 + $0x70] sm:$0xff]
        %v254 = vld [vmem:[%s198 + $0x78] sm:$0xff]
        %v255 = vld [vmem:[%s198 + $0x80] sm:$0xff]
        %v256 = vld [vmem:[%s198 + $0x88] sm:$0xff]
        %v257 = vld [vmem:[%s198 + $0x90] sm:$0xff]
        %v258 = vld [vmem:[%s198 + $0x98] sm:$0xff]
        %v259 = vld [vmem:[%s198 + $0xa0] sm:$0xff]
        %v260 = vld [vmem:[%s198 + $0xa8] sm:$0xff]
        %v261 = vld [vmem:[%s198 + $0xb0] sm:$0xff]
        %v262 = vld [vmem:[%s198 + $0xb8] sm:$0xff]
        %v263 = vld [vmem:[%s198 + $0xc0] sm:$0xff]
        %v264 = vld [vmem:[%s198 + $0xc8] sm:$0xff]
        %v265 = vld [vmem:[%s198 + $0xd0] sm:$0xff]
        %v266 = vld [vmem:[%s198 + $0xd8] sm:$0xff]
        %v267 = vld [vmem:[%s198 + $0xe0] sm:$0xff]
        %v268 = vld [vmem:[%s198 + $0xe8] sm:$0xff]
        %v269 = vld [vmem:[%s198 + $0xf0] sm:$0xff]
        %v270 = vld [vmem:[%s198 + $0xf8] sm:$0xff]
        %v271 = vld [vmem:[%s198 + $0x100] sm:$0xff]
        %v272 = vld [vmem:[%s198 + $0x108] sm:$0xff]
        %v273 = vld [vmem:[%s198 + $0x110] sm:$0xff]
        %v274 = vld [vmem:[%s198 + $0x118] sm:$0xff]
        %v275 = vld [vmem:[%s198 + $0x120] sm:$0xff]
        %v276 = vld [vmem:[%s198 + $0x128] sm:$0xff]
        %v277 = vld [vmem:[%s198 + $0x130] sm:$0xff]
        %v278 = vld [vmem:[%s198 + $0x138] sm:$0xff]
        %v279 = vld [vmem:[%s198 + $0x140] sm:$0xff]
        %v280 = vld [vmem:[%s198 + $0x148] sm:$0xff]
        %v281 = vld [vmem:[%s198 + $0x150] sm:$0xff]
        %v282 = vld [vmem:[%s198 + $0x158] sm:$0xff]
        %v283 = vld [vmem:[%s198 + $0x160] sm:$0xff]
        %v284 = vld [vmem:[%s198 + $0x168] sm:$0xff]
        %v285 = vld [vmem:[%s198 + $0x170] sm:$0xff]
        %v286 = vld [vmem:[%s198 + $0x178] sm:$0xff]
        %v287 = vld [vmem:[%s198 + $0x180] sm:$0xff]
        %v288 = vld [vmem:[%s198 + $0x188] sm:$0xff]
        %v289 = vld [vmem:[%s198 + $0x190] sm:$0xff]
        %v290 = vld [vmem:[%s198 + $0x198] sm:$0xff]
        %v291 = vld [vmem:[%s198 + $0x1a0] sm:$0xff]
        %v292 = vld [vmem:[%s198 + $0x1a8] sm:$0xff]
        %v293 = vld [vmem:[%s198 + $0x1b0] sm:$0xff]
        %v294 = vld [vmem:[%s198 + $0x1b8] sm:$0xff]
        %v295 = vld [vmem:[%s198 + $0x1c0] sm:$0xff]
        %v296 = vld [vmem:[%s198 + $0x1c8] sm:$0xff]
        %v297 = vld [vmem:[%s198 + $0x1d0] sm:$0xff]
        %v298 = vld [vmem:[%s198 + $0x1d8] sm:$0xff]
        %v299 = vld [vmem:[%s198 + $0x1e0] sm:$0xff]
        %v300 = vld [vmem:[%s198 + $0x1e8] sm:$0xff]
        %v301 = vld [vmem:[%s198 + $0x1f0] sm:$0xff]
        %v302 = vld [vmem:[%s198 + $0x1f8] sm:$0xff]
        %v303 = vsub.f32 0.0, %v239
        %v304 = vsub.f32 0.0, %v240
        %v305 = vsub.f32 0.0, %v241
        %v306 = vsub.f32 0.0, %v242
        %v307 = vsub.f32 0.0, %v243
        %v308 = vsub.f32 0.0, %v244
        %v309 = vsub.f32 0.0, %v245
        %v310 = vsub.f32 0.0, %v246
        %v311 = vsub.f32 0.0, %v247
        %v312 = vsub.f32 0.0, %v248
        %v313 = vsub.f32 0.0, %v249
        %v314 = vsub.f32 0.0, %v250
        %v315 = vsub.f32 0.0, %v251
        %v316 = vsub.f32 0.0, %v252
        %v317 = vsub.f32 0.0, %v253
        %v318 = vsub.f32 0.0, %v254
        %v319 = vsub.f32 0.0, %v255
        %v320 = vsub.f32 0.0, %v256
        %v321 = vsub.f32 0.0, %v257
        %v322 = vsub.f32 0.0, %v258
        %v323 = vsub.f32 0.0, %v259
        %v324 = vsub.f32 0.0, %v260
        %v325 = vsub.f32 0.0, %v261
        %v326 = vsub.f32 0.0, %v262
        %v327 = vsub.f32 0.0, %v263
        %v328 = vsub.f32 0.0, %v264
        %v329 = vsub.f32 0.0, %v265
        %v330 = vsub.f32 0.0, %v266
        %v331 = vsub.f32 0.0, %v267
        %v332 = vsub.f32 0.0, %v268
        %v333 = vsub.f32 0.0, %v269
        %v334 = vsub.f32 0.0, %v270
        %v335 = vsub.f32 0.0, %v271
        %v336 = vsub.f32 0.0, %v272
        %v337 = vsub.f32 0.0, %v273
        %v338 = vsub.f32 0.0, %v274
        %v339 = vsub.f32 0.0, %v275
        %v340 = vsub.f32 0.0, %v276
        %v341 = vsub.f32 0.0, %v277
        %v342 = vsub.f32 0.0, %v278
        %v343 = vsub.f32 0.0, %v279
        %v344 = vsub.f32 0.0, %v280
        %v345 = vsub.f32 0.0, %v281
        %v346 = vsub.f32 0.0, %v282
        %v347 = vsub.f32 0.0, %v283
        %v348 = vsub.f32 0.0, %v284
        %v349 = vsub.f32 0.0, %v285
        %v350 = vsub.f32 0.0, %v286
        %v351 = vsub.f32 0.0, %v287
        %v352 = vsub.f32 0.0, %v288
        %v353 = vsub.f32 0.0, %v289
        %v354 = vsub.f32 0.0, %v290
        %v355 = vsub.f32 0.0, %v291
        %v356 = vsub.f32 0.0, %v292
        %v357 = vsub.f32 0.0, %v293
        %v358 = vsub.f32 0.0, %v294
        %v359 = vsub.f32 0.0, %v295
        %v360 = vsub.f32 0.0, %v296
        %v361 = vsub.f32 0.0, %v297
        %v362 = vsub.f32 0.0, %v298
        %v363 = vsub.f32 0.0, %v299
        %v364 = vsub.f32 0.0, %v300
        %v365 = vsub.f32 0.0, %v301
        %v366 = vsub.f32 0.0, %v302
        %v367 = vmax.f32 %v303, %v307
        %v368 = vmax.f32 %v304, %v308
        %v369 = vmax.f32 %v305, %v309
        %v370 = vmax.f32 %v306, %v310
        %v371 = vmax.f32 %v367, %v311
        %v372 = vmax.f32 %v368, %v312
        %v373 = vmax.f32 %v369, %v313
        %v374 = vmax.f32 %v370, %v314
        %v375 = vmax.f32 %v371, %v315
        %v376 = vmax.f32 %v372, %v316
        %v377 = vmax.f32 %v373, %v317
        %v378 = vmax.f32 %v374, %v318
        %v379 = vmax.f32 %v375, %v319
        %v380 = vmax.f32 %v376, %v320
        %v381 = vmax.f32 %v377, %v321
        %v382 = vmax.f32 %v378, %v322
        %v383 = vmax.f32 %v379, %v323
        %v384 = vmax.f32 %v380, %v324
        %v385 = vmax.f32 %v381, %v325
        %v386 = vmax.f32 %v382, %v326
        %v387 = vmax.f32 %v383, %v327
        %v388 = vmax.f32 %v384, %v328
        %v389 = vmax.f32 %v385, %v329
        %v390 = vmax.f32 %v386, %v330
        %v391 = vmax.f32 %v387, %v331
        %v392 = vmax.f32 %v388, %v332
        %v393 = vmax.f32 %v389, %v333
        %v394 = vmax.f32 %v390, %v334
        %v395 = vmax.f32 %v391, %v335
        %v396 = vmax.f32 %v392, %v336
        %v397 = vmax.f32 %v393, %v337
        %v398 = vmax.f32 %v394, %v338
        %v399 = vmax.f32 %v395, %v339
        %v400 = vmax.f32 %v396, %v340
        %v401 = vmax.f32 %v397, %v341
        %v402 = vmax.f32 %v398, %v342
        %v403 = vmax.f32 %v399, %v343
        %v404 = vmax.f32 %v400, %v344
        %v405 = vmax.f32 %v401, %v345
        %v406 = vmax.f32 %v402, %v346
        %v407 = vmax.f32 %v403, %v347
        %v408 = vmax.f32 %v404, %v348
        %v409 = vmax.f32 %v405, %v349
        %v410 = vmax.f32 %v406, %v350
        %v411 = vmax.f32 %v407, %v351
        %v412 = vmax.f32 %v408, %v352
        %v413 = vmax.f32 %v409, %v353
        %v414 = vmax.f32 %v410, %v354
        %v415 = vmax.f32 %v411, %v355
        %v416 = vmax.f32 %v412, %v356
        %v417 = vmax.f32 %v413, %v357
        %v418 = vmax.f32 %v414, %v358
        %v419 = vmax.f32 %v415, %v359
        %v420 = vmax.f32 %v416, %v360
        %v421 = vmax.f32 %v417, %v361
        %v422 = vmax.f32 %v418, %v362
        %v423 = vmax.f32 %v419, %v363
        %v424 = vmax.f32 %v420, %v364
        %v425 = vmax.f32 %v421, %v365
        %v426 = vmax.f32 %v422, %v366
        %v427 = vmax.f32 %v423, %v424
        %v428 = vmax.f32 %v425, %v426
        %v429 = vmax.f32 %v427, %v428
        %v430 = vrot.slane %v429, 4
        %v431 = vmax.f32 %v429, %v430
        %v432 = vrot.slane %v431, 2
        %v433 = vmax.f32 %v431, %v432
        %v434 = vrot.slane %v433, 1
        %v435 = vmax.f32 %v433, %v434
        %v436 = vsub.f32 %v303, %v435
        %v437 = vsub.f32 %v304, %v435
        %v438 = vsub.f32 %v305, %v435
        %v439 = vsub.f32 %v306, %v435
        %v440 = vsub.f32 %v307, %v435
        %v441 = vsub.f32 %v308, %v435
        %v442 = vsub.f32 %v309, %v435
        %v443 = vsub.f32 %v310, %v435
        %v444 = vsub.f32 %v311, %v435
        %v445 = vsub.f32 %v312, %v435
        %v446 = vsub.f32 %v313, %v435
        %v447 = vsub.f32 %v314, %v435
        %v448 = vsub.f32 %v315, %v435
        %v449 = vsub.f32 %v316, %v435
        %v450 = vsub.f32 %v317, %v435
        %v451 = vsub.f32 %v318, %v435
        %v452 = vsub.f32 %v319, %v435
        %v453 = vsub.f32 %v320, %v435
        %v454 = vsub.f32 %v321, %v435
        %v455 = vsub.f32 %v322, %v435
        %v456 = vsub.f32 %v323, %v435
        %v457 = vsub.f32 %v324, %v435
        %v458 = vsub.f32 %v325, %v435
        %v459 = vsub.f32 %v326, %v435
        %v460 = vsub.f32 %v327, %v435
        %v461 = vsub.f32 %v328, %v435
        %v462 = vsub.f32 %v329, %v435
        %v463 = vsub.f32 %v330, %v435
        %v464 = vsub.f32 %v331, %v435
        %v465 = vsub.f32 %v332, %v435
        %v466 = vsub.f32 %v333, %v435
        %v467 = vsub.f32 %v334, %v435
        %v468 = vsub.f32 %v335, %v435
        %v469 = vsub.f32 %v336, %v435
        %v470 = vsub.f32 %v337, %v435
        %v471 = vsub.f32 %v338, %v435
        %v472 = vsub.f32 %v339, %v435
        %v473 = vsub.f32 %v340, %v435
        %v474 = vsub.f32 %v341, %v435
        %v475 = vsub.f32 %v342, %v435
        %v476 = vsub.f32 %v343, %v435
        %v477 = vsub.f32 %v344, %v435
        %v478 = vsub.f32 %v345, %v435
        %v479 = vsub.f32 %v346, %v435
        %v480 = vsub.f32 %v347, %v435
        %v481 = vsub.f32 %v348, %v435
        %v482 = vsub.f32 %v349, %v435
        %v483 = vsub.f32 %v350, %v435
        %v484 = vsub.f32 %v351, %v435
        %v485 = vsub.f32 %v352, %v435
        %v486 = vsub.f32 %v353, %v435
        %v487 = vsub.f32 %v354, %v435
        %v488 = vsub.f32 %v355, %v435
        %v489 = vsub.f32 %v356, %v435
        %v490 = vsub.f32 %v357, %v435
        %v491 = vsub.f32 %v358, %v435
        %v492 = vsub.f32 %v359, %v435
        %v493 = vsub.f32 %v360, %v435
        %v494 = vsub.f32 %v361, %v435
        %v495 = vsub.f32 %v362, %v435
        %v496 = vsub.f32 %v363, %v435
        %v497 = vsub.f32 %v364, %v435
        %v498 = vsub.f32 %v365, %v435
        %v499 = vsub.f32 %v366, %v435
        %v500 = vmul.f32 %v436, 1.442695
        %v501 = vpow.pop %v500
        %v502 = vmul.f32 %v437, 1.442695
        %v503 = vpow.pop %v502
        %v504 = vmul.f32 %v438, 1.442695
        %v505 = vpow.pop %v504
        %v506 = vmul.f32 %v439, 1.442695
        %v507 = vpow.pop %v506
        %v508 = vmul.f32 %v440, 1.442695
        %v509 = vpow.pop %v508
        %v510 = vmul.f32 %v441, 1.442695
        %v511 = vpow.pop %v510
        %v512 = vmul.f32 %v442, 1.442695
        %v513 = vpow.pop %v512
        %v514 = vmul.f32 %v443, 1.442695
        %v515 = vpow.pop %v514
        %v516 = vmul.f32 %v444, 1.442695
        %v517 = vpow.pop %v516
        %v518 = vmul.f32 %v445, 1.442695
        %v519 = vpow.pop %v518
        %v520 = vmul.f32 %v446, 1.442695
        %v521 = vpow.pop %v520
        %v522 = vmul.f32 %v447, 1.442695
        %v523 = vpow.pop %v522
        %v524 = vmul.f32 %v448, 1.442695
        %v525 = vpow.pop %v524
        %v526 = vmul.f32 %v449, 1.442695
        %v527 = vpow.pop %v526
        %v528 = vmul.f32 %v450, 1.442695
        %v529 = vpow.pop %v528
        %v530 = vmul.f32 %v451, 1.442695
        %v531 = vpow.pop %v530
        %v532 = vmul.f32 %v452, 1.442695
        %v533 = vpow.pop %v532
        %v534 = vmul.f32 %v453, 1.442695
        %v535 = vpow.pop %v534
        %v536 = vmul.f32 %v454, 1.442695
        %v537 = vpow.pop %v536
        %v538 = vmul.f32 %v455, 1.442695
        %v539 = vpow.pop %v538
        %v540 = vmul.f32 %v456, 1.442695
        %v541 = vpow.pop %v540
        %v542 = vmul.f32 %v457, 1.442695
        %v543 = vpow.pop %v542
        %v544 = vmul.f32 %v458, 1.442695
        %v545 = vpow.pop %v544
        %v546 = vmul.f32 %v459, 1.442695
        %v547 = vpow.pop %v546
        %v548 = vmul.f32 %v460, 1.442695
        %v549 = vpow.pop %v548
        %v550 = vmul.f32 %v461, 1.442695
        %v551 = vpow.pop %v550
        %v552 = vmul.f32 %v462, 1.442695
        %v553 = vpow.pop %v552
        %v554 = vmul.f32 %v463, 1.442695
        %v555 = vpow.pop %v554
        %v556 = vmul.f32 %v464, 1.442695
        %v557 = vpow.pop %v556
        %v558 = vmul.f32 %v465, 1.442695
        %v559 = vpow.pop %v558
        %v560 = vmul.f32 %v466, 1.442695
        %v561 = vpow.pop %v560
        %v562 = vmul.f32 %v467, 1.442695
        %v563 = vpow.pop %v562
        %v564 = vmul.f32 %v468, 1.442695
        %v565 = vpow.pop %v564
        %v566 = vmul.f32 %v469, 1.442695
        %v567 = vpow.pop %v566
        %v568 = vmul.f32 %v470, 1.442695
        %v569 = vpow.pop %v568
        %v570 = vmul.f32 %v471, 1.442695
        %v571 = vpow.pop %v570
        %v572 = vmul.f32 %v472, 1.442695
        %v573 = vpow.pop %v572
        %v574 = vmul.f32 %v473, 1.442695
        %v575 = vpow.pop %v574
        %v576 = vmul.f32 %v474, 1.442695
        %v577 = vpow.pop %v576
        %v578 = vmul.f32 %v475, 1.442695
        %v579 = vpow.pop %v578
        %v580 = vmul.f32 %v476, 1.442695
        %v581 = vpow.pop %v580
        %v582 = vmul.f32 %v477, 1.442695
        %v583 = vpow.pop %v582
        %v584 = vmul.f32 %v478, 1.442695
        %v585 = vpow.pop %v584
        %v586 = vmul.f32 %v479, 1.442695
        %v587 = vpow.pop %v586
        %v588 = vmul.f32 %v480, 1.442695
        %v589 = vpow.pop %v588
        %v590 = vmul.f32 %v481, 1.442695
        %v591 = vpow.pop %v590
        %v592 = vmul.f32 %v482, 1.442695
        %v593 = vpow.pop %v592
        %v594 = vmul.f32 %v483, 1.442695
        %v595 = vpow.pop %v594
        %v596 = vmul.f32 %v484, 1.442695
        %v597 = vpow.pop %v596
        %v598 = vmul.f32 %v485, 1.442695
        %v599 = vpow.pop %v598
        %v600 = vmul.f32 %v486, 1.442695
        %v601 = vpow.pop %v600
        %v602 = vmul.f32 %v487, 1.442695
        %v603 = vpow.pop %v602
        %v604 = vmul.f32 %v488, 1.442695
        %v605 = vpow.pop %v604
        %v606 = vmul.f32 %v489, 1.442695
        %v607 = vpow.pop %v606
        %v608 = vmul.f32 %v490, 1.442695
        %v609 = vpow.pop %v608
        %v610 = vmul.f32 %v491, 1.442695
        %v611 = vpow.pop %v610
        %v612 = vmul.f32 %v492, 1.442695
        %v613 = vpow.pop %v612
        %v614 = vmul.f32 %v493, 1.442695
        %v615 = vpow.pop %v614
        %v616 = vmul.f32 %v494, 1.442695
        %v617 = vpow.pop %v616
        %v618 = vmul.f32 %v495, 1.442695
        %v619 = vpow.pop %v618
        %v620 = vmul.f32 %v496, 1.442695
        %v621 = vpow.pop %v620
        %v622 = vmul.f32 %v497, 1.442695
        %v623 = vpow.pop %v622
        %v624 = vmul.f32 %v498, 1.442695
        %v625 = vpow.pop %v624
        %v626 = vmul.f32 %v499, 1.442695
        %v627 = vpow.pop %v626
        %v628 = vld [vmem:[#allocation7] sm:$0xff]
        %v629 = vld [vmem:[#allocation7 + $0x8] sm:$0xff]
        %v630 = vld [vmem:[#allocation7 + $0x10] sm:$0xff]
        %v631 = vld [vmem:[#allocation7 + $0x18] sm:$0xff]
        %632 = vmatprep.subr.mxu0 0.0
        %633 = vmatpush1.msra.mxu0 %v501
        %634 = vmatprep.subr.mxu0 0.0
        %635 = vmatpush1.msra.mxu0 %v503
        %636 = vmatprep.subr.mxu0 0.0
        %637 = vmatpush1.msra.mxu0 %v505
        %638 = vmatprep.subr.mxu0 0.0
        %639 = vmatpush1.msra.mxu0 %v507
        %640 = vmatprep.subr.mxu0 0.0
        %641 = vmatpush1.msra.mxu0 %v509
        %642 = vmatprep.subr.mxu0 0.0
        %643 = vmatpush1.msra.mxu0 %v511
        %644 = vmatprep.subr.mxu0 0.0
        %645 = vmatpush1.msra.mxu0 %v513
        %646 = vmatprep.subr.mxu0 0.0
        %647 = vmatpush1.msra.mxu0 %v515
        %648 = vmatprep.subr.mxu0 0.0
        %649 = vmatpush1.msra.mxu0 %v517
        %650 = vmatprep.subr.mxu0 0.0
        %651 = vmatpush1.msra.mxu0 %v519
        %652 = vmatprep.subr.mxu0 0.0
        %653 = vmatpush1.msra.mxu0 %v521
        %654 = vmatprep.subr.mxu0 0.0
        %655 = vmatpush1.msra.mxu0 %v523
        %656 = vmatprep.subr.mxu0 0.0
        %657 = vmatpush1.msra.mxu0 %v525
        %658 = vmatprep.subr.mxu0 0.0
        %659 = vmatpush1.msra.mxu0 %v527
        %660 = vmatprep.subr.mxu0 0.0
        %661 = vmatpush1.msra.mxu0 %v529
        %662 = vmatprep.subr.mxu0 0.0
        %663 = vmatpush1.msra.mxu0 %v531
        %664 = vmatprep.subr.mxu0 0.0
        %665 = vmatpush1.msra.mxu0 %v533
        %666 = vmatprep.subr.mxu0 0.0
        %667 = vmatpush1.msra.mxu0 %v535
        %668 = vmatprep.subr.mxu0 0.0
        %669 = vmatpush1.msra.mxu0 %v537
        %670 = vmatprep.subr.mxu0 0.0
        %671 = vmatpush1.msra.mxu0 %v539
        %672 = vmatprep.subr.mxu0 0.0
        %673 = vmatpush1.msra.mxu0 %v541
        %674 = vmatprep.subr.mxu0 0.0
        %675 = vmatpush1.msra.mxu0 %v543
        %676 = vmatprep.subr.mxu0 0.0
        %677 = vmatpush1.msra.mxu0 %v545
        %678 = vmatprep.subr.mxu0 0.0
        %679 = vmatpush1.msra.mxu0 %v547
        %680 = vmatprep.subr.mxu0 0.0
        %681 = vmatpush1.msra.mxu0 %v549
        %682 = vmatprep.subr.mxu0 0.0
        %683 = vmatpush1.msra.mxu0 %v551
        %684 = vmatprep.subr.mxu0 0.0
        %685 = vmatpush1.msra.mxu0 %v553
        %686 = vmatprep.subr.mxu0 0.0
        %687 = vmatpush1.msra.mxu0 %v555
        %688 = vmatprep.subr.mxu0 0.0
        %689 = vmatpush1.msra.mxu0 %v557
        %690 = vmatprep.subr.mxu0 0.0
        %691 = vmatpush1.msra.mxu0 %v559
        %692 = vmatprep.subr.mxu0 0.0
        %693 = vmatpush1.msra.mxu0 %v561
        %694 = vmatprep.subr.mxu0 0.0
        %695 = vmatpush1.msra.mxu0 %v563
        %696 = vmatprep.mubr.f32.mxu0 %v629
        %697 = vmatmul.mubr.f32.gmra.mrb[0].mxu0 %v628
        %v698 = vpop.f32.mrb[0].mxu0
        %v699 = vadd.f32 0.0, %v698
        %v700 = vpop.f32.mrb[0].mxu0
        %701 = vdwg.mxu0
        %702 = vmatprep.subr.mxu0 0.0
        %703 = vmatpush1.msra.mxu0 %v565
        %704 = vmatprep.subr.mxu0 0.0
        %705 = vmatpush1.msra.mxu0 %v567
        %706 = vmatprep.subr.mxu0 0.0
        %707 = vmatpush1.msra.mxu0 %v569
        %708 = vmatprep.subr.mxu0 0.0
        %709 = vmatpush1.msra.mxu0 %v571
        %710 = vmatprep.subr.mxu0 0.0
        %711 = vmatpush1.msra.mxu0 %v573
        %712 = vmatprep.subr.mxu0 0.0
        %713 = vmatpush1.msra.mxu0 %v575
        %714 = vmatprep.subr.mxu0 0.0
        %715 = vmatpush1.msra.mxu0 %v577
        %716 = vmatprep.subr.mxu0 0.0
        %717 = vmatpush1.msra.mxu0 %v579
        %718 = vmatprep.subr.mxu0 0.0
        %719 = vmatpush1.msra.mxu0 %v581
        %720 = vmatprep.subr.mxu0 0.0
        %721 = vmatpush1.msra.mxu0 %v583
        %722 = vmatprep.subr.mxu0 0.0
        %723 = vmatpush1.msra.mxu0 %v585
        %724 = vmatprep.subr.mxu0 0.0
        %725 = vmatpush1.msra.mxu0 %v587
        %726 = vmatprep.subr.mxu0 0.0
        %727 = vmatpush1.msra.mxu0 %v589
        %728 = vmatprep.subr.mxu0 0.0
        %729 = vmatpush1.msra.mxu0 %v591
        %730 = vmatprep.subr.mxu0 0.0
        %731 = vmatpush1.msra.mxu0 %v593
        %732 = vmatprep.subr.mxu0 0.0
        %733 = vmatpush1.msra.mxu0 %v595
        %734 = vmatprep.subr.mxu0 0.0
        %735 = vmatpush1.msra.mxu0 %v597
        %736 = vmatprep.subr.mxu0 0.0
        %737 = vmatpush1.msra.mxu0 %v599
        %738 = vmatprep.subr.mxu0 0.0
        %739 = vmatpush1.msra.mxu0 %v601
        %740 = vmatprep.subr.mxu0 0.0
        %741 = vmatpush1.msra.mxu0 %v603
        %742 = vmatprep.subr.mxu0 0.0
        %743 = vmatpush1.msra.mxu0 %v605
        %744 = vmatprep.subr.mxu0 0.0
        %745 = vmatpush1.msra.mxu0 %v607
        %746 = vmatprep.subr.mxu0 0.0
        %747 = vmatpush1.msra.mxu0 %v609
        %748 = vmatprep.subr.mxu0 0.0
        %749 = vmatpush1.msra.mxu0 %v611
        %750 = vmatprep.subr.mxu0 0.0
        %751 = vmatpush1.msra.mxu0 %v613
        %752 = vmatprep.subr.mxu0 0.0
        %753 = vmatpush1.msra.mxu0 %v615
        %754 = vmatprep.subr.mxu0 0.0
        %755 = vmatpush1.msra.mxu0 %v617
        %756 = vmatprep.subr.mxu0 0.0
        %757 = vmatpush1.msra.mxu0 %v619
        %758 = vmatprep.subr.mxu0 0.0
        %759 = vmatpush1.msra.mxu0 %v621
        %760 = vmatprep.subr.mxu0 0.0
        %761 = vmatpush1.msra.mxu0 %v623
        %762 = vmatprep.subr.mxu0 0.0
        %763 = vmatpush1.msra.mxu0 %v625
        %764 = vmatprep.subr.mxu0 0.0
        %765 = vmatpush1.msra.mxu0 %v627
        %766 = vmatprep.mubr.f32.mxu0 %v631
        %767 = vmatmul.mubr.f32.gmra.mrb[0].mxu0 %v630
        %v768 = vpop.f32.mrb[0].mxu0
        %v769 = vadd.f32 %v699, %v768
        %v770 = vpop.f32.mrb[0].mxu0
        %771 = vdwg.mxu0
        %v772 = vrcp.pop %v769
        %v773 = vmul.f32 1.0, %v772
        %v775 = vrot.slane %v773, 7
        %v777 = vmul.f32 %v769, %v775
        %v778 = vrot.slane %v773, 6
        %v780 = vmul.f32 %v769, %v778
        %v781 = vrot.slane %v773, 5
        %v783 = vmul.f32 %v769, %v781
        %v784 = vrot.slane %v773, 4
        %v786 = vmul.f32 %v769, %v784
        %v787 = vmul.f32 %v777, %v777
        %v789 = vrot.slane %v787, 5
        %v791 = vsub.f32 %v786, %v789
        %v792 = vrot.slane %v773, 3
        %v794 = vmul.f32 %v769, %v792
        %v795 = vmul.f32 %v780, %v780
        %v797 = vrot.slane %v795, 5
        %v799 = vsub.f32 %v794, %v797
        %v800 = vrot.slane %v773, 2
        %v802 = vmul.f32 %v769, %v800
        %v803 = vmul.f32 %v783, %v783
        %v805 = vrot.slane %v803, 5
        %v807 = vsub.f32 %v802, %v805
        %v808 = vld [vmem:[%s207] sm:$0x1]
        %v809 = vld [vmem:[%s207 + $0x1] sm:$0x1]
        %v810 = vld [vmem:[%s207 + $0x2] sm:$0x1]
        %v811 = vld [vmem:[%s207 + $0x3] sm:$0x1]
        %v812 = vld [vmem:[%s207 + $0x4] sm:$0x1]
        %v813 = vld [vmem:[%s207 + $0x5] sm:$0x1]
        %v814 = vld [vmem:[%s207 + $0x6] sm:$0x1]
        %v815 = vld [vmem:[%s207 + $0x7] sm:$0x1]
        %v816 = vld [vmem:[%s207 + $0x8] sm:$0x1]
        %v817 = vld [vmem:[%s207 + $0x9] sm:$0x1]
        %v818 = vld [vmem:[%s207 + $0xa] sm:$0x1]
        %v819 = vld [vmem:[%s207 + $0xb] sm:$0x1]
        %v820 = vld [vmem:[%s207 + $0xc] sm:$0x1]
        %v821 = vld [vmem:[%s207 + $0xd] sm:$0x1]
        %v822 = vld [vmem:[%s207 + $0xe] sm:$0x1]
        %v824 = vrot.slane %v783, 3
        %v826 = vadd.f32 %v813, %v824
        %v827 = vadd.f32 %v826, 3.1415927
        %v828 = vrcp.pop 6.2831855
        %v829 = vmul.f32 %v827, %v828
        %v830 = vfloor.f32 %v829
        %v831 = vmul.f32 %v830, 6.2831855
        %v832 = vsub.f32 %v826, %v831
        %vm833 = vcmp.le.f32.partialorder %v832, -3.1415927
        %v834 = vadd.f32 %v832, 6.2831855
        %v835 = vsel %vm833, %v834, %v832
        %v836 = vand.u32 2147483647, %v835
        %vm837 = vcmp.le.f32.partialorder %v836, 0.7853982
        %vm838 = vcmp.lt.s32.totalorder %v835, 0
        %v839 = vand.u32 %v835, 2139095040
        %v840 = vshrl.u32 %v839, 23
        %v841 = vsub.s32 %v840, 127
        %v842 = vand.u32 2147483647, %v835
        %v843 = vand.u32 %v842, 8388607
        %v844 = vor.u32 %v843, 8388608
        %v845 = vsub.s32 0, %v844
        %v846 = vadd.s32 %v841, 1
        %vm847 = vcmp.gt.s32.totalorder %v846, 0
        %v848 = vsel %vm847, %v846, 0
        %v849 = vshrl.u32 %v848, 5
        %v850 = vand.u32 %v848, 31
        %v851 = vsub.s32 32, %v850
        %v852 = vshrl.u32 683565275, %v851
        %v853 = vshll.u32 683565275, %v850
        %v854 = vshrl.u32 2475754826, %v851
        %v855 = vor.u32 %v853, %v854
        %v856 = vshll.u32 2475754826, %v850
        %v857 = vshrl.u32 2131351028, %v851
        %v858 = vor.u32 %v856, %v857
        %v859 = vshll.u32 2131351028, %v850
        %v860 = vshrl.u32 2102212464, %v851
        %v861 = vor.u32 %v859, %v860
        %v862 = vshll.u32 2102212464, %v850
        %v863 = vshrl.u32 920167782, %v851
        %v864 = vor.u32 %v862, %v863
        %v865 = vshll.u32 920167782, %v850
        %v866 = vshrl.u32 1326507024, %v851
        %v867 = vor.u32 %v865, %v866
        %vm868 = vcmp.lt.s32.totalorder %v849, 1
        %vm869 = vcmp.lt.s32.totalorder %v849, 2
        %vm870 = vcmp.lt.s32.totalorder %v849, 3
        %vm871 = vcmp.lt.s32.totalorder %v849, 4
        %v872 = vsel %vm868, %v852, %v855
        %v873 = vsel %vm871, %v861, 2102212464
        %v874 = vsel %vm870, %v858, %v873
        %v875 = vsel %vm869, %v872, %v874
        %v876 = vsel %vm868, %v855, %v858
        %v877 = vsel %vm871, %v864, 920167782
        %v878 = vsel %vm870, %v861, %v877
        %v879 = vsel %vm869, %v876, %v878
        %v880 = vsel %vm868, %v858, %v861
        %v881 = vsel %vm871, %v867, 1326507024
        %v882 = vsel %vm870, %v864, %v881
        %v883 = vsel %vm869, %v880, %v882
        %v884 = vshll.u32 %v844, 8
        %v885 = vmul.u32.u64.compose %v884, %v883
        %v886 = vextract.low.u32 %v885
        %v887 = vextract.high.u32 %v885
        %v888 = vmul.u32.u64.compose %v884, %v879
        %v889 = vextract.low.u32 %v888
        %v890 = vextract.high.u32 %v888
        %v891 = vmul.u32 %v884, %v875
        %v892 = vadd.s32 %v887, %v889
        %vm893 = vc.u32 %v887, %v889
        %v894 = vadd.s32 %v890, 1
        %v895 = vsel %vm893, %v894, %v890
        %v896 = vadd.s32 %v891, %v895
        %v897 = vadd.s32 %v896, 536870912
        %v898 = vshrl.u32 %v897, 30
        %v899 = vshll.u32 %v898, 30
        %v900 = vsub.s32 %v896, %v899
        %vm901 = vcmp.lt.s32.totalorder %v900, 0
        %v902 = vsub.s32 0, %v900
        %v903 = vsel %vm901, %v902, %v900
        %v904 = vclz %v903
        %v905 = vsub.s32 %v904, 2
        %vm906 = vcmp.gt.s32.totalorder 0, %v905
        %v907 = vsel %vm906, 0, %v905
        %v908 = vsub.s32 32, %v907
        %v909 = vshll.u32 %v900, %v907
        %v910 = vshrl.u32 %v892, %v908
        %v911 = vor.u32 %v909, %v910
        %v912 = vsub.s32 4294967266, %v907
        %v913 = vadd.s32 %v912, 127
        %v914 = vshll.u32 %v913, 23
        %v915 = vor.u32 4788187, %v914
        %v916 = vand.u32 2147483647, %v915
        %v918 = vcvt.s32.f32 %v911
        %v919 = vmul.f32 %v918, %v916
        %v920 = vxor.u32 %v919, 2147483648
        %v921 = vsel %vm838, %v920, %v919
        %v922 = vsub.s32 4, %v898
        %v923 = vsel %vm838, %v922, %v898
        %v924 = vsel %vm837, %v835, %v921
        %v925 = vsel %vm837, 0, %v923
        %v926 = vcosq.f32.pop %v924
        %v927 = vsinq.f32.pop %v924
        %vm928 = vweird.f32 %v835
        %v929 = vand.u32 %v925, 3
        %vm930 = vcmp.lt.s32.totalorder %v929, 2
        %vm931 = vcmp.eq.s32.totalorder %v929, 0
        %v932 = vxor.u32 %v927, 2147483648
        %v933 = vsel %vm931, %v926, %v932
        %vm934 = vcmp.eq.s32.totalorder %v929, 2
        %v935 = vxor.u32 %v926, 2147483648
        %v936 = vsel %vm934, %v935, %v927
        %v937 = vsel %vm930, %v933, %v936
        %v938 = vsel %vm928, nan, %v937
        %v939 = vand.u32 2147483647, %v835
        %vm940 = vcmp.le.f32.partialorder %v939, 0.7853982
        %vm941 = vcmp.lt.s32.totalorder %v835, 0
        %v942 = vand.u32 %v835, 2139095040
        %v943 = vshrl.u32 %v942, 23
        %v944 = vsub.s32 %v943, 127
        %v945 = vand.u32 2147483647, %v835
        %v946 = vand.u32 %v945, 8388607
        %v947 = vor.u32 %v946, 8388608
        %v948 = vsub.s32 0, %v947
        %v949 = vadd.s32 %v944, 1
        %vm950 = vcmp.gt.s32.totalorder %v949, 0
        %v951 = vsel %vm950, %v949, 0
        %v952 = vshrl.u32 %v951, 5
        %v953 = vand.u32 %v951, 31
        %v954 = vsub.s32 32, %v953
        %v955 = vshrl.u32 683565275, %v954
        %v956 = vshll.u32 683565275, %v953
        %v957 = vshrl.u32 2475754826, %v954
        %v958 = vor.u32 %v956, %v957
        %v959 = vshll.u32 2475754826, %v953
        %v960 = vshrl.u32 2131351028, %v954
        %v961 = vor.u32 %v959, %v960
        %v962 = vshll.u32 2131351028, %v953
        %v963 = vshrl.u32 2102212464, %v954
        %v964 = vor.u32 %v962, %v963
        %v965 = vshll.u32 2102212464, %v953
        %v966 = vshrl.u32 920167782, %v954
        %v967 = vor.u32 %v965, %v966
        %v968 = vshll.u32 920167782, %v953
        %v969 = vshrl.u32 1326507024, %v954
        %v970 = vor.u32 %v968, %v969
        %vm971 = vcmp.lt.s32.totalorder %v952, 1
        %vm972 = vcmp.lt.s32.totalorder %v952, 2
        %vm973 = vcmp.lt.s32.totalorder %v952, 3
        %vm974 = vcmp.lt.s32.totalorder %v952, 4
        %v975 = vsel %vm971, %v955, %v958
        %v976 = vsel %vm974, %v964, 2102212464
        %v977 = vsel %vm973, %v961, %v976
        %v978 = vsel %vm972, %v975, %v977
        %v979 = vsel %vm971, %v958, %v961
        %v980 = vsel %vm974, %v967, 920167782
        %v981 = vsel %vm973, %v964, %v980
        %v982 = vsel %vm972, %v979, %v981
        %v983 = vsel %vm971, %v961, %v964
        %v984 = vsel %vm974, %v970, 1326507024
        %v985 = vsel %vm973, %v967, %v984
        %v986 = vsel %vm972, %v983, %v985
        %v987 = vshll.u32 %v947, 8
        %v988 = vmul.u32.u64.compose %v987, %v986
        %v989 = vextract.low.u32 %v988
        %v990 = vextract.high.u32 %v988
        %v991 = vmul.u32.u64.compose %v987, %v982
        %v992 = vextract.low.u32 %v991
        %v993 = vextract.high.u32 %v991
        %v994 = vmul.u32 %v987, %v978
        %v995 = vadd.s32 %v990, %v992
        %vm996 = vc.u32 %v990, %v992
        %v997 = vadd.s32 %v993, 1
        %v998 = vsel %vm996, %v997, %v993
        %v999 = vadd.s32 %v994, %v998
        %v1000 = vadd.s32 %v999, 536870912
        %v1001 = vshrl.u32 %v1000, 30
        %v1002 = vshll.u32 %v1001, 30
        %v1003 = vsub.s32 %v999, %v1002
        %vm1004 = vcmp.lt.s32.totalorder %v1003, 0
        %v1005 = vsub.s32 0, %v1003
        %v1006 = vsel %vm1004, %v1005, %v1003
        %v1007 = vclz %v1006
        %v1008 = vsub.s32 %v1007, 2
        %vm1009 = vcmp.gt.s32.totalorder 0, %v1008
        %v1010 = vsel %vm1009, 0, %v1008
        %v1011 = vsub.s32 32, %v1010
        %v1012 = vshll.u32 %v1003, %v1010
        %v1013 = vshrl.u32 %v995, %v1011
        %v1014 = vor.u32 %v1012, %v1013
        %v1015 = vsub.s32 4294967266, %v1010
        %v1016 = vadd.s32 %v1015, 127
        %v1017 = vshll.u32 %v1016, 23
        %v1018 = vor.u32 4788187, %v1017
        %v1019 = vand.u32 2147483647, %v1018
        %v1021 = vcvt.s32.f32 %v1014
        %v1022 = vmul.f32 %v1021, %v1019
        %v1023 = vxor.u32 %v1022, 2147483648
        %v1024 = vsel %vm941, %v1023, %v1022
        %v1025 = vsub.s32 4, %v1001
        %v1026 = vsel %vm941, %v1025, %v1001
        %v1027 = vsel %vm940, %v835, %v1024
        %v1028 = vsel %vm940, 0, %v1026
        %v1029 = vcosq.f32.pop %v1027
        %v1030 = vsinq.f32.pop %v1027
        %vm1031 = vweird.f32 %v835
        %v1032 = vadd.s32 %v1028, 3
        %v1033 = vand.u32 %v1032, 3
        %vm1034 = vcmp.lt.s32.totalorder %v1033, 2
        %vm1035 = vcmp.eq.s32.totalorder %v1033, 0
        %v1036 = vxor.u32 %v1030, 2147483648
        %v1037 = vsel %vm1035, %v1029, %v1036
        %vm1038 = vcmp.eq.s32.totalorder %v1033, 2
        %v1039 = vxor.u32 %v1029, 2147483648
        %v1040 = vsel %vm1038, %v1039, %v1030
        %v1041 = vsel %vm1034, %v1037, %v1040
        %v1042 = vsel %vm1031, nan, %v1041
        %v1044 = vrot.slane %v777, 1
        %v1046 = vmul.f32 %v938, %v1044
        %v1047 = vadd.f32 %v811, %v1046
        %v1049 = vrot.slane %v780, 2
        %v1051 = vmul.f32 %v1042, %v1049
        %v1052 = vsub.f32 %v1047, %v1051
        %v1053 = vmul.f32 %v1042, %v1044
        %v1054 = vadd.f32 %v812, %v1053
        %v1055 = vmul.f32 %v938, %v1049
        %v1056 = vadd.f32 %v1054, %v1055
        %v1058 = vrot.slane %v791, 4
        %v1060 = vadd.f32 %v814, %v1058
        %v1062 = vrot.slane %v799, 5
        %v1064 = vadd.f32 %v818, %v1062
        %v1066 = vrot.slane %v807, 6
        %v1068 = vadd.f32 %v822, %v1066
        %v1069 = vmul.f32 %v1064, %v1068
        %v1070 = vmul.f32 %v819, %v821
        %v1071 = vsub.f32 %v1069, %v1070
        %v1072 = vmul.f32 %v817, %v1068
        %v1073 = vmul.f32 %v819, %v820
        %v1074 = vsub.f32 %v1072, %v1073
        %v1075 = vsub.f32 0.0, %v1074
        %v1076 = vmul.f32 %v817, %v821
        %v1077 = vmul.f32 %v1064, %v820
        %v1078 = vsub.f32 %v1076, %v1077
        %v1079 = vmul.f32 %v815, %v1068
        %v1080 = vmul.f32 %v816, %v821
        %v1081 = vsub.f32 %v1079, %v1080
        %v1082 = vsub.f32 0.0, %v1081
        %v1083 = vmul.f32 %v1060, %v1068
        %v1084 = vmul.f32 %v816, %v820
        %v1085 = vsub.f32 %v1083, %v1084
        %v1086 = vmul.f32 %v1060, %v821
        %v1087 = vmul.f32 %v815, %v820
        %v1088 = vsub.f32 %v1086, %v1087
        %v1089 = vsub.f32 0.0, %v1088
        %v1090 = vmul.f32 %v815, %v819
        %v1091 = vmul.f32 %v816, %v1064
        %v1092 = vsub.f32 %v1090, %v1091
        %v1093 = vmul.f32 %v1060, %v819
        %v1094 = vmul.f32 %v816, %v817
        %v1095 = vsub.f32 %v1093, %v1094
        %v1096 = vsub.f32 0.0, %v1095
        %v1097 = vmul.f32 %v1060, %v1064
        %v1098 = vmul.f32 %v815, %v817
        %v1099 = vsub.f32 %v1097, %v1098
        %v1100 = vmul.f32 %v1060, %v1071
        %v1101 = vmul.f32 %v815, %v1075
        %v1102 = vadd.f32 %v1100, %v1101
        %v1103 = vmul.f32 %v816, %v1078
        %v1104 = vadd.f32 %v1102, %v1103
        %v1105 = vrcp.pop %v1104
        %v1106 = vmul.f32 1.0, %v1105
        %v1107 = vmul.f32 %v1071, %v1106
        %v1108 = vmul.f32 %v1082, %v1106
        %v1109 = vmul.f32 %v1092, %v1106
        %v1110 = vmul.f32 %v1075, %v1106
        %v1111 = vmul.f32 %v1085, %v1106
        %v1112 = vmul.f32 %v1096, %v1106
        %v1113 = vmul.f32 %v1078, %v1106
        %v1114 = vmul.f32 %v1089, %v1106
        %v1115 = vmul.f32 %v1099, %v1106
        %v1116 = vmul.f32 %v814, %v1107
        %v1117 = vmul.f32 %v815, %v1110
        %v1118 = vadd.f32 %v1116, %v1117
        %v1119 = vmul.f32 %v816, %v1113
        %v1120 = vadd.f32 %v1118, %v1119
        %v1121 = vmul.f32 %v814, %v1108
        %v1122 = vmul.f32 %v815, %v1111
        %v1123 = vadd.f32 %v1121, %v1122
        %v1124 = vmul.f32 %v816, %v1114
        %v1125 = vadd.f32 %v1123, %v1124
        %v1126 = vmul.f32 %v814, %v1109
        %v1127 = vmul.f32 %v815, %v1112
        %v1128 = vadd.f32 %v1126, %v1127
        %v1129 = vmul.f32 %v816, %v1115
        %v1130 = vadd.f32 %v1128, %v1129
        %v1131 = vmul.f32 %v817, %v1107
        %v1132 = vmul.f32 %v818, %v1110
        %v1133 = vadd.f32 %v1131, %v1132
        %v1134 = vmul.f32 %v819, %v1113
        %v1135 = vadd.f32 %v1133, %v1134
        %v1136 = vmul.f32 %v817, %v1108
        %v1137 = vmul.f32 %v818, %v1111
        %v1138 = vadd.f32 %v1136, %v1137
        %v1139 = vmul.f32 %v819, %v1114
        %v1140 = vadd.f32 %v1138, %v1139
        %v1141 = vmul.f32 %v817, %v1109
        %v1142 = vmul.f32 %v818, %v1112
        %v1143 = vadd.f32 %v1141, %v1142
        %v1144 = vmul.f32 %v819, %v1115
        %v1145 = vadd.f32 %v1143, %v1144
        %v1146 = vmul.f32 %v820, %v1107
        %v1147 = vmul.f32 %v821, %v1110
        %v1148 = vadd.f32 %v1146, %v1147
        %v1149 = vmul.f32 %v822, %v1113
        %v1150 = vadd.f32 %v1148, %v1149
        %v1151 = vmul.f32 %v820, %v1108
        %v1152 = vmul.f32 %v821, %v1111
        %v1153 = vadd.f32 %v1151, %v1152
        %v1154 = vmul.f32 %v822, %v1114
        %v1155 = vadd.f32 %v1153, %v1154
        %v1156 = vmul.f32 %v820, %v1109
        %v1157 = vmul.f32 %v821, %v1112
        %v1158 = vadd.f32 %v1156, %v1157
        %v1159 = vmul.f32 %v822, %v1115
        %v1160 = vadd.f32 %v1158, %v1159
        %v1161 = vsub.f32 %v1052, %v811
        %v1162 = vsub.f32 %v1056, %v812
        %v1163 = vsub.f32 %v835, %v813
        %v1164 = vadd.f32 %v1163, 3.1415927
        %v1165 = vmul.f32 %v1164, %v828
        %v1166 = vfloor.f32 %v1165
        %v1167 = vmul.f32 %v1166, 6.2831855
        %v1168 = vsub.f32 %v1163, %v1167
        %vm1169 = vcmp.le.f32.partialorder %v1168, -3.1415927
        %v1170 = vadd.f32 %v1168, 6.2831855
        %v1171 = vsel %vm1169, %v1170, %v1168
        %v1172 = vmul.f32 %v1120, %v1161
        %v1173 = vmul.f32 %v1125, %v1162
        %v1174 = vadd.f32 %v1172, %v1173
        %v1175 = vmul.f32 %v1130, %v1171
        %v1176 = vadd.f32 %v1174, %v1175
        %v1177 = vmul.f32 %v1135, %v1161
        %v1178 = vmul.f32 %v1140, %v1162
        %v1179 = vadd.f32 %v1177, %v1178
        %v1180 = vmul.f32 %v1145, %v1171
        %v1181 = vadd.f32 %v1179, %v1180
        %v1182 = vmul.f32 %v1150, %v1161
        %v1183 = vmul.f32 %v1155, %v1162
        %v1184 = vadd.f32 %v1182, %v1183
        %v1185 = vmul.f32 %v1160, %v1171
        %v1186 = vadd.f32 %v1184, %v1185
        %v1187 = vadd.f32 %v811, %v1176
        %v1188 = vadd.f32 %v812, %v1181
        %v1189 = vadd.f32 %v813, %v1186
        %v1190 = vadd.f32 %v1189, 3.1415927
        %v1191 = vmul.f32 %v1190, %v828
        %v1192 = vfloor.f32 %v1191
        %v1193 = vmul.f32 %v1192, 6.2831855
        %v1194 = vsub.f32 %v1189, %v1193
        %vm1195 = vcmp.le.f32.partialorder %v1194, -3.1415927
        %v1196 = vadd.f32 %v1194, 6.2831855
        %v1197 = vsel %vm1195, %v1196, %v1194
        %v1198 = vsub.f32 1.0, %v1120
        %v1199 = vsub.f32 0.0, %v1125
        %v1200 = vsub.f32 0.0, %v1130
        %v1201 = vsub.f32 0.0, %v1135
        %v1202 = vsub.f32 1.0, %v1140
        %v1203 = vsub.f32 0.0, %v1145
        %v1204 = vsub.f32 0.0, %v1150
        %v1205 = vsub.f32 0.0, %v1155
        %v1206 = vsub.f32 1.0, %v1160
        %v1207 = vmul.f32 %v1198, %v814
        %v1208 = vmul.f32 %v1199, %v817
        %v1209 = vadd.f32 %v1207, %v1208
        %v1210 = vmul.f32 %v1200, %v820
        %v1211 = vadd.f32 %v1209, %v1210
        %v1212 = vmul.f32 %v1198, %v815
        %v1213 = vmul.f32 %v1199, %v818
        %v1214 = vadd.f32 %v1212, %v1213
        %v1215 = vmul.f32 %v1200, %v821
        %v1216 = vadd.f32 %v1214, %v1215
        %v1217 = vmul.f32 %v1198, %v816
        %v1218 = vmul.f32 %v1199, %v819
        %v1219 = vadd.f32 %v1217, %v1218
        %v1220 = vmul.f32 %v1200, %v822
        %v1221 = vadd.f32 %v1219, %v1220
        %v1222 = vmul.f32 %v1201, %v814
        %v1223 = vmul.f32 %v1202, %v817
        %v1224 = vadd.f32 %v1222, %v1223
        %v1225 = vmul.f32 %v1203, %v820
        %v1226 = vadd.f32 %v1224, %v1225
        %v1227 = vmul.f32 %v1201, %v815
        %v1228 = vmul.f32 %v1202, %v818
        %v1229 = vadd.f32 %v1227, %v1228
        %v1230 = vmul.f32 %v1203, %v821
        %v1231 = vadd.f32 %v1229, %v1230
        %v1232 = vmul.f32 %v1201, %v816
        %v1233 = vmul.f32 %v1202, %v819
        %v1234 = vadd.f32 %v1232, %v1233
        %v1235 = vmul.f32 %v1203, %v822
        %v1236 = vadd.f32 %v1234, %v1235
        %v1237 = vmul.f32 %v1204, %v814
        %v1238 = vmul.f32 %v1205, %v817
        %v1239 = vadd.f32 %v1237, %v1238
        %v1240 = vmul.f32 %v1206, %v820
        %v1241 = vadd.f32 %v1239, %v1240
        %v1242 = vmul.f32 %v1204, %v815
        %v1243 = vmul.f32 %v1205, %v818
        %v1244 = vadd.f32 %v1242, %v1243
        %v1245 = vmul.f32 %v1206, %v821
        %v1246 = vadd.f32 %v1244, %v1245
        %v1247 = vmul.f32 %v1204, %v816
        %v1248 = vmul.f32 %v1205, %v819
        %v1249 = vadd.f32 %v1247, %v1248
        %v1250 = vmul.f32 %v1206, %v822
        %v1251 = vadd.f32 %v1249, %v1250
        %v1252 = vsub.f32 %v808, %v1187
        %v1253 = vsub.f32 %v809, %v1188
        %v1254 = vsub.f32 %v810, %v1197
        %v1255 = vadd.f32 %v1254, 3.1415927
        %v1256 = vmul.f32 %v1255, %v828
        %v1257 = vfloor.f32 %v1256
        %v1258 = vmul.f32 %v1257, 6.2831855
        %v1259 = vsub.f32 %v1254, %v1258
        %vm1260 = vcmp.le.f32.partialorder %v1259, -3.1415927
        %v1261 = vadd.f32 %v1259, 6.2831855
        %v1262 = vsel %vm1260, %v1261, %v1259
        %v1263 = vmul.f32 %v1231, %v1251
        %v1264 = vmul.f32 %v1236, %v1246
        %v1265 = vsub.f32 %v1263, %v1264
        %v1266 = vmul.f32 %v1226, %v1251
        %v1267 = vmul.f32 %v1236, %v1241
        %v1268 = vsub.f32 %v1266, %v1267
        %v1269 = vsub.f32 0.0, %v1268
        %v1270 = vmul.f32 %v1226, %v1246
        %v1271 = vmul.f32 %v1231, %v1241
        %v1272 = vsub.f32 %v1270, %v1271
        %v1273 = vmul.f32 %v1216, %v1251
        %v1274 = vmul.f32 %v1221, %v1246
        %v1275 = vsub.f32 %v1273, %v1274
        %v1276 = vsub.f32 0.0, %v1275
        %v1277 = vmul.f32 %v1211, %v1251
        %v1278 = vmul.f32 %v1221, %v1241
        %v1279 = vsub.f32 %v1277, %v1278
        %v1280 = vmul.f32 %v1211, %v1246
        %v1281 = vmul.f32 %v1216, %v1241
        %v1282 = vsub.f32 %v1280, %v1281
        %v1283 = vsub.f32 0.0, %v1282
        %v1284 = vmul.f32 %v1216, %v1236
        %v1285 = vmul.f32 %v1221, %v1231
        %v1286 = vsub.f32 %v1284, %v1285
        %v1287 = vmul.f32 %v1211, %v1236
        %v1288 = vmul.f32 %v1221, %v1226
        %v1289 = vsub.f32 %v1287, %v1288
        %v1290 = vsub.f32 0.0, %v1289
        %v1291 = vmul.f32 %v1211, %v1231
        %v1292 = vmul.f32 %v1216, %v1226
        %v1293 = vsub.f32 %v1291, %v1292
        %v1294 = vmul.f32 %v1211, %v1265
        %v1295 = vmul.f32 %v1216, %v1269
        %v1296 = vadd.f32 %v1294, %v1295
        %v1297 = vmul.f32 %v1221, %v1272
        %v1298 = vadd.f32 %v1296, %v1297
        %v1299 = vrcp.pop %v1298
        %v1300 = vmul.f32 1.0, %v1299
        %v1301 = vmul.f32 %v1265, %v1300
        %v1302 = vmul.f32 %v1276, %v1300
        %v1303 = vmul.f32 %v1286, %v1300
        %v1304 = vmul.f32 %v1269, %v1300
        %v1305 = vmul.f32 %v1279, %v1300
        %v1306 = vmul.f32 %v1290, %v1300
        %v1307 = vmul.f32 %v1272, %v1300
        %v1308 = vmul.f32 %v1283, %v1300
        %v1309 = vmul.f32 %v1293, %v1300
        %v1310 = vmul.f32 %v1301, %v1252
        %v1311 = vmul.f32 %v1302, %v1253
        %v1312 = vadd.f32 %v1310, %v1311
        %v1313 = vmul.f32 %v1303, %v1262
        %v1314 = vadd.f32 %v1312, %v1313
        %v1315 = vmul.f32 %v1304, %v1252
        %v1316 = vmul.f32 %v1305, %v1253
        %v1317 = vadd.f32 %v1315, %v1316
        %v1318 = vmul.f32 %v1306, %v1262
        %v1319 = vadd.f32 %v1317, %v1318
        %v1320 = vmul.f32 %v1307, %v1252
        %v1321 = vmul.f32 %v1308, %v1253
        %v1322 = vadd.f32 %v1320, %v1321
        %v1323 = vmul.f32 %v1309, %v1262
        %v1324 = vadd.f32 %v1322, %v1323
        %v1325 = vmul.f32 %v1252, %v1314
        %v1326 = vmul.f32 %v1253, %v1319
        %v1327 = vadd.f32 %v1325, %v1326
        %v1328 = vmul.f32 %v1262, %v1324
        %v1329 = vadd.f32 %v1327, %v1328
        %v1330 = vmul.f32 %v1216, %v1268
        %v1331 = vsub.f32 %v1294, %v1330
        %v1332 = vadd.f32 %v1331, %v1297
        %v1333 = vmul.f32 %v1332, 0.1
        %v1334 = vadd.f32 %v1329, %v1333
        %1335 = vst [vmem:[%s238] sm:$0x1] %v1334
        %1336 = vst [vmem:[%s238 + $0x1] sm:$0x1] %v1187
        %1337 = vst [vmem:[%s238 + $0x2] sm:$0x1] %v1188
        %1338 = vst [vmem:[%s238 + $0x3] sm:$0x1] %v1197
        %1339 = vst [vmem:[%s238 + $0x4] sm:$0x1] %v1211
        %1340 = vst [vmem:[%s238 + $0x5] sm:$0x1] %v1216
        %1341 = vst [vmem:[%s238 + $0x6] sm:$0x1] %v1221
        %1342 = vst [vmem:[%s238 + $0x7] sm:$0x1] %v1226
        %1343 = vst [vmem:[%s238 + $0x8] sm:$0x1] %v1231
        %1344 = vst [vmem:[%s238 + $0x9] sm:$0x1] %v1236
        %1345 = vst [vmem:[%s238 + $0xa] sm:$0x1] %v1241
        %1346 = vst [vmem:[%s238 + $0xb] sm:$0x1] %v1246
        %1347 = vst [vmem:[%s238 + $0xc] sm:$0x1] %v1251
        %1348 = vst [vmem:[%s238 + $0xd] sm:$0x7] 0.0
        %s1349 = sand.u32 %s104, 1
        %s1350 = scalar_lea.sflag [#allocation4], %s1349
        %s1351 = sand.u32 %s104, 1
        %s1352 = smul.addr %s1351, 16
        %s1353 = scalar_lea.vmem [#allocation8], %s1352
        // Predicated region
        $region45: #{tpu_custom_call.1} parent=31 // pred_check
          %p1354 = pneg %p114
        $region46: #{tpu_custom_call.1} parent=31 // pred_check_branch
          %1356 = sbr.rel (%p1354) target = $region48
        $region47: #{tpu_custom_call.1} parent=31 // pred_region
          %s1358 = ssub.s32 256, 256
          %1359 = vsyncadd %s1350, %s1358
          %s1360 = smul.addr %s23, 128
          %s1361 = scalar_lea.hbm %s3, %s1360
          %s1362 = sshll.u32 %s1353, 4
          %s1363 = int_to_ptr.vmem [resolvable:$true] %s1362
          %1368 = dma.vmem_to_hbm [thread:$0]  %s1363, 256, %s1361, %s1350, 128, 256, 8
        $region48: #{tpu_custom_call.1} parent=31 // pred_fallthru
          _
      $region32: #{tpu_custom_call.1} parent=5 // pred_fallthru
        _
      %p1369 = scmp.le.s32.totalorder 2, %s18
      // Predicated region
      $region49: #{tpu_custom_call.1} parent=5 // pred_check
        %p1370 = pneg %p1369
      $region50: #{tpu_custom_call.1} parent=5 // pred_check_branch
        %1372 = sbr.rel (%p1370) target = $region52
      $region51: #{tpu_custom_call.1} parent=5 // pred_region
        %s1373 = ssub.s32 %s18, 2
        // Predicated region
        $region53: #{tpu_custom_call.1} parent=51 // pred_check
          %p1374 = pneg %p120
        $region54: #{tpu_custom_call.1} parent=51 // pred_check_branch
          %1376 = sbr.rel (%p1374) target = $region56
        $region55: #{tpu_custom_call.1} parent=51 // pred_region
          %s1377 = sand.u32 %s105, 1
          %s1378 = scalar_lea.sflag [#allocation4], %s1377
          %s1379 = sand.u32 %s105, 1
          %s1380 = smul.addr %s1379, 16
          %s1381 = scalar_lea.vmem [#allocation8], %s1380
          %1382 = dma.done %s1378, 256
        $region56: #{tpu_custom_call.1} parent=51 // pred_fallthru
          _
      $region52: #{tpu_custom_call.1} parent=5 // pred_fallthru
        _
    $region6: #{tpu_custom_call.1} parent=1 // loop_footer
      %s22 = sadd.s32 1, %s18
    $region7: #{tpu_custom_call.1} parent=1 // loop_footer_branch
      %17 = sbr.rel target = $region3
    $region8: #{tpu_custom_call.1} parent=1 // loop_exit
      _
    %1383 = vsyncpa [#allocation3], 1
    %s1384 = scalar_lea.sflag [#allocation3], 1
    %1385 = vsyncpa %s1384, 1
    %1386 = vsyncpa [#allocation6], 1
    %s1387 = scalar_lea.sflag [#allocation6], 1
    %1388 = vsyncpa %s1387, 1
    %1389 = vsyncpa [#allocation4], 1
    %s1390 = scalar_lea.sflag [#allocation4], 1
    %1391 = vsyncpa %s1390, 1

</llo_original>
